<compile_context>
chip_gen: v6e
topology: v6e:2x2x1
jax: 0.10.0
libtpu: 0.0.40
codegen_flags: <defaults>
</compile_context>

<pallas_src>
import jax
import jax.numpy as jnp
from jax import lax
from jax.experimental import pallas as pl
from jax.experimental.pallas import tpu as pltpu

EMBED = 300  # self.embed in the module


# ----------------------------------------------------------------------------
# Pallas kernel: full DPCNN_v1 forward for a fixed (static) sequence length.
# ----------------------------------------------------------------------------
def dpcnn_kernel(x_ref, u_ref, c_ref, wc3_ref, bc_ref, wf_ref, bf_ref,
                 out_ref, pad_ref):
    x = x_ref[...]                        # [BB, S]
    BB, S = x.shape
    u = u_ref[...]                        # [3, F]   rank-1 fused conv_region taps
    c = c_ref[...]                        # [1, F]   fused conv_region bias
    wc3 = wc3_ref[...]                    # [3F, F]  tap-fused (3,1) conv weight
    bc = bc_ref[...]                      # [1, F]
    wf = wf_ref[...]                      # [F, C]
    bf = bf_ref[...]                      # [1, C]
    F = u.shape[-1]
    H0 = S - 2

    # hoisted loop invariants (JAX does not CSE broadcasts / zero fills)
    zrow = jnp.zeros((BB, 1, F), jnp.float32)      # halo row of zeros
    cb = c.reshape(1, 1, F)                        # broadcast-ready fused bias

    def conv3_same(a):
        # torch: padding1 -> relu -> Conv2d(F, F, (3,1)) VALID   (relu(0)=0, so
        # we write relu(a) into the interior of the padded scratch).
        B_, H_, _ = a.shape
        pad_ref[:, 0:1, :] = zrow                      # top halo
        pad_ref[:, H_ + 1:H_ + 2, :] = zrow            # bottom halo
        pad_ref[:, 1:H_ + 1, :] = jnp.maximum(a, 0.0)  # relu fused with pad write
        # tap-major window: [a[h-1] | a[h] | a[h+1]] along lanes -> [BB, H, 3F]
        win = jnp.concatenate(
            [pad_ref[:, 0:H_, :], pad_ref[:, 1:H_ + 1, :], pad_ref[:, 2:H_ + 2, :]],
            axis=-1)
        y = jnp.dot(win.reshape(B_ * H_, 3 * F), wc3,
                    preferred_element_type=jnp.float32) + bc
        return y.reshape(B_, H_, F)

    def maxpool3s2(a):
        # torch: padding2 (one zero row at the bottom) -> MaxPool2d((3,1), stride=2)
        B_, H_, _ = a.shape
        Ho = (H_ - 2) // 2 + 1                     # = ((H_+1) - 3)//2 + 1
        pad_ref[:, 0:H_, :] = a
        pad_ref[:, H_:H_ + 1, :] = zrow            # bottom zero pad (clears stale rows)
        top = pad_ref[:, pl.ds(0, Ho, 2), :]       # a_pad[2h]
        mid = pad_ref[:, pl.ds(1, Ho, 2), :]       # a_pad[2h+1]
        bot = pad_ref[:, pl.ds(2, Ho, 2), :]       # a_pad[2h+2]
        return jnp.maximum(top, jnp.maximum(mid, bot))

    # nn1 + conv_region, algebraically fused (exact):
    #   emb[b,s,:] = x[b,s]*w1 + b1  is rank-1, so
    #   conv_region[:, h, :] = sum_i x[:, h+i] * u[i] + c        (pure VPU work)
    h = (x[:, 0:H0, None] * u[0, :][None, None, :]
         + x[:, 1:H0 + 1, None] * u[1, :][None, None, :]
         + x[:, 2:H0 + 2, None] * u[2, :][None, None, :]
         + cb)                                                   # [BB, H0, F]

    h = conv3_same(h)                                            # conv #1
    h = conv3_same(h)                                            # conv #2

    # repeated down-sampling blocks; shapes are static -> unrolled at trace time
    while h.shape[1] > 2:
        px = maxpool3s2(h)
        y = conv3_same(px)
        y = conv3_same(y)
        h = y + px

    # H == 1 here (checked in the wrapper), matching torch's x.squeeze()
    feat = h.reshape(BB, F)
    # TODO(synk): matmul operands could be cast to bf16 (MXU-native) at scale; kept
    # f32 here since the kernel is overhead-bound at F=16 and it preserves the 1e-3 check.
    out_ref[...] = jnp.dot(feat, wf, preferred_element_type=jnp.float32) + bf


# ----------------------------------------------------------------------------
# One-time weight repacking (hoisted out of the per-call path).
# ----------------------------------------------------------------------------
def pack_params(params):
    w1, b1, wr, br, wc, bc, wf, bf = params          # PyTorch-native shapes
    F = wr.shape[0]
    C = wf.shape[0]
    wrk = jnp.transpose(wr[:, 0, :, :], (1, 2, 0))               # [3, 300, F]
    u = jnp.einsum('e,tef->tf', w1[:, 0], wrk)                   # [3, F]
    c = (jnp.einsum('e,tef->f', b1, wrk) + br).reshape(1, F)     # [1, F]
    wc3 = jnp.transpose(wc[:, :, :, 0], (2, 1, 0)).reshape(3 * F, F)   # [3F, F]
    bck = bc.reshape(1, F)
    wfk = wf.T                                                    # [F, C]
    bfk = bf.reshape(1, C)
    return (u, c, wc3, bck, wfk, bfk)


# ----------------------------------------------------------------------------
# Wrapper: batch-tiled pallas_call.
# ----------------------------------------------------------------------------
def dpcnn_forward(x, packed):
    u, c, wc3, bc, wf, bf = packed
    B, S = x.shape
    F = wc3.shape[-1]
    C = wf.shape[-1]
    H0 = S - 2

    # The torch module only works if the down-sampling loop terminates at H == 1
    # (otherwise x.squeeze() feeds the wrong shape into fc); make that explicit.
    Hh = H0
    while Hh > 2:
        Hh = (Hh - 2) // 2 + 1
    assert Hh == 1, f"seq len {S} leaves H={Hh} != 1 before fc (torch would fail too)"

    # Batch grid: shard across TensorCores (v7x megacore) when the batch tiles
    # cleanly into sublane-aligned blocks; at toy sizes this degenerates to grid=(1,).
    BB = 8 if (B % 8 == 0 and B > 8) else B
    grid = (B // BB,)

    full = lambda a: pl.BlockSpec(tuple(a.shape), lambda i: (0,) * a.ndim)
    return pl.pallas_call(
        dpcnn_kernel,
        out_shape=jax.ShapeDtypeStruct((B, C), jnp.float32),
        grid=grid,
        in_specs=[pl.BlockSpec((BB, S), lambda i: (i, 0)),       # x: tiled over batch
                  full(u), full(c), full(wc3), full(bc), full(wf), full(bf)],
        out_specs=pl.BlockSpec((BB, C), lambda i: (i, 0)),
        scratch_shapes=[pltpu.VMEM((BB, H0 + 2, F), jnp.float32)],   # padded-H scratch
        compiler_params=pltpu.CompilerParams(
            dimension_semantics=("parallel",)),
    )(x, u, c, wc3, bc, wf, bf)


# ----------------------------------------------------------------------------
# Pure-JAX reference mirroring the PyTorch NCHW semantics (for verification).
# ----------------------------------------------------------------------------
def torch_reference(x, params):
    w1, b1, wr, br, wc, bc, wf, bf = params
    dn = ('NCHW', 'OIHW', 'NCHW')
    conv = lambda a, w, b: lax.conv_general_dilated(
        a, w, (1, 1), 'VALID', dimension_numbers=dn) + b[None, :, None, None]
    pad11 = lambda a: jnp.pad(a, ((0, 0), (0, 0), (1, 1), (0, 0)))
    pad01 = lambda a: jnp.pad(a, ((0, 0), (0, 0), (0, 1), (0, 0)))
    maxpool = lambda a: lax.reduce_window(a, -jnp.inf, lax.max,
                                          (1, 1, 3, 1), (1, 1, 2, 1), 'VALID')
    relu = lambda a: jnp.maximum(a, 0.0)

    e = x[:, :, None] * w1[None, None, :, 0] + b1[None, None, :]     # [B, S, 300]
    h = e[:, None, :, :]                                             # NCHW [B,1,S,300]
    h = conv(h, wr, br)                                              # [B, F, S-2, 1]
    h = conv(relu(pad11(h)), wc, bc)
    h = conv(relu(pad11(h)), wc, bc)
    while h.shape[2] > 2:
        px = maxpool(pad01(h))
        y = conv(relu(pad11(px)), wc, bc)
        y = conv(relu(pad11(y)), wc, bc)
        h = y + px
    feat = h.reshape(h.shape[0], -1)                                 # [B, F]
    return feat @ wf.T + bf[None, :]


# ----------------------------------------------------------------------------
# Deterministic parameter init (PyTorch-native shapes).
# ----------------------------------------------------------------------------
def make_params(key, num_filters, num_classes):
    ks = jax.random.split(key, 8)
    w1 = jax.random.normal(ks[0], (EMBED, 1), jnp.float32) * 0.10      # nn1.weight
    b1 = jax.random.normal(ks[1], (EMBED,), jnp.float32) * 0.10        # nn1.bias
    wr = jax.random.normal(ks[2], (num_filters, 1, 3, EMBED), jnp.float32) * 0.05
    br = jax.random.normal(ks[3], (num_filters,), jnp.float32) * 0.05
    wc = jax.random.normal(ks[4], (num_filters, num_filters, 3, 1), jnp.float32) * 0.10
    bc = jax.random.normal(ks[5], (num_filters,), jnp.float32) * 0.10
    wf = jax.random.normal(ks[6], (num_classes, num_filters), jnp.float32) * 0.10
    bf = jax.random.normal(ks[7], (num_classes,), jnp.float32) * 0.10
    return (w1, b1, wr, br, wc, bc, wf, bf)


if __name__ == "__main__":
    B, S = 2, 8                 # seq len 8 -> H: 6 -> 3 -> 1 (loop terminates at 1)
    NUM_FILTERS, NUM_CLASSES = 16, 4

    key = jax.random.PRNGKey(0)
    kx, kp = jax.random.split(key)
    x = jax.random.normal(kx, (B, S), jnp.float32)
    params = make_params(kp, NUM_FILTERS, NUM_CLASSES)

    packed = pack_params(params)          # one-time repack, outside the hot path
    out = dpcnn_forward(x, packed)
    jax.block_until_ready(out)

    ref = torch_reference(x, params)
    assert out.shape == (B, NUM_CLASSES), out.shape
    assert jnp.allclose(out, ref, atol=1e-3, rtol=1e-3), (out, ref)
    print("KERNEL_OK")
</pallas_src>

<mosaic_0001>
module attributes {stable_mosaic.version = 11 : i64} {
  func.func @dpcnn_kernel(%arg0: i32, %arg1: memref<2x8xf32, #tpu.memory_space<vmem>>, %arg2: memref<3x16xf32, #tpu.memory_space<vmem>>, %arg3: memref<1x16xf32, #tpu.memory_space<vmem>>, %arg4: memref<48x16xf32, #tpu.memory_space<vmem>>, %arg5: memref<1x16xf32, #tpu.memory_space<vmem>>, %arg6: memref<16x4xf32, #tpu.memory_space<vmem>>, %arg7: memref<1x4xf32, #tpu.memory_space<vmem>>, %arg8: memref<2x4xf32, #tpu.memory_space<vmem>>, %arg9: memref<2x8x16xf32, #tpu.memory_space<vmem>>) attributes {dimension_semantics = [#tpu.dimension_semantics<parallel>], iteration_bounds = array<i64: 1>, scalar_prefetch = 0 : i64, scratch_operands = 1 : i64, tpu.core_type = #tpu.core_type<tc>, window_params = [{transform_indices = @transform_0, window_bounds = array<i64: 2, 8>}, {pipeline_mode = #tpu.pipeline_mode<synchronous>, transform_indices = @transform_1, window_bounds = array<i64: 3, 16>}, {pipeline_mode = #tpu.pipeline_mode<synchronous>, transform_indices = @transform_2, window_bounds = array<i64: 1, 16>}, {pipeline_mode = #tpu.pipeline_mode<synchronous>, transform_indices = @transform_3, window_bounds = array<i64: 48, 16>}, {pipeline_mode = #tpu.pipeline_mode<synchronous>, transform_indices = @transform_4, window_bounds = array<i64: 1, 16>}, {pipeline_mode = #tpu.pipeline_mode<synchronous>, transform_indices = @transform_5, window_bounds = array<i64: 16, 4>}, {pipeline_mode = #tpu.pipeline_mode<synchronous>, transform_indices = @transform_6, window_bounds = array<i64: 1, 4>}, {transform_indices = @transform_7, window_bounds = array<i64: 2, 4>}]} {
    %c0 = arith.constant 0 : index
    %c0_0 = arith.constant 0 : index
    %0 = vector.load %arg1[%c0, %c0_0] : memref<2x8xf32, #tpu.memory_space<vmem>>, vector<2x8xf32>
    %c0_1 = arith.constant 0 : index
    %c0_2 = arith.constant 0 : index
    %1 = vector.load %arg2[%c0_1, %c0_2] : memref<3x16xf32, #tpu.memory_space<vmem>>, vector<3x16xf32>
    %c0_3 = arith.constant 0 : index
    %c0_4 = arith.constant 0 : index
    %2 = vector.load %arg3[%c0_3, %c0_4] : memref<1x16xf32, #tpu.memory_space<vmem>>, vector<1x16xf32>
    %c0_5 = arith.constant 0 : index
    %c0_6 = arith.constant 0 : index
    %3 = vector.load %arg4[%c0_5, %c0_6] : memref<48x16xf32, #tpu.memory_space<vmem>>, vector<48x16xf32>
    %c0_7 = arith.constant 0 : index
    %c0_8 = arith.constant 0 : index
    %4 = vector.load %arg5[%c0_7, %c0_8] : memref<1x16xf32, #tpu.memory_space<vmem>>, vector<1x16xf32>
    %c0_9 = arith.constant 0 : index
    %c0_10 = arith.constant 0 : index
    %5 = vector.load %arg6[%c0_9, %c0_10] : memref<16x4xf32, #tpu.memory_space<vmem>>, vector<16x4xf32>
    %c0_11 = arith.constant 0 : index
    %c0_12 = arith.constant 0 : index
    %6 = vector.load %arg7[%c0_11, %c0_12] : memref<1x4xf32, #tpu.memory_space<vmem>>, vector<1x4xf32>
    %cst = arith.constant 0.000000e+00 : f32
    %7 = vector.broadcast %cst : f32 to vector<2x1x16xf32>
    %8 = vector.shape_cast %2 : vector<1x16xf32> to vector<1x1x16xf32>
    %9 = vector.extract_strided_slice %0 {offsets = [0, 0], sizes = [2, 6], strides = [1, 1]} : vector<2x8xf32> to vector<2x6xf32>
    %10 = vector.shape_cast %9 : vector<2x6xf32> to vector<2x6x1xf32>
    %11 = vector.extract_strided_slice %1 {offsets = [0, 0], sizes = [1, 16], strides = [1, 1]} : vector<3x16xf32> to vector<1x16xf32>
    %12 = vector.shape_cast %11 : vector<1x16xf32> to vector<16xf32>
    %13 = vector.shape_cast %12 : vector<16xf32> to vector<1x1x16xf32>
    %14 = vector.broadcast %10 : vector<2x6x1xf32> to vector<2x6x16xf32>
    %15 = vector.broadcast %13 : vector<1x1x16xf32> to vector<2x6x16xf32>
    %16 = arith.mulf %14, %15 : vector<2x6x16xf32>
    %17 = vector.extract_strided_slice %0 {offsets = [0, 1], sizes = [2, 6], strides = [1, 1]} : vector<2x8xf32> to vector<2x6xf32>
    %18 = vector.shape_cast %17 : vector<2x6xf32> to vector<2x6x1xf32>
    %19 = vector.extract_strided_slice %1 {offsets = [1, 0], sizes = [1, 16], strides = [1, 1]} : vector<3x16xf32> to vector<1x16xf32>
    %20 = vector.shape_cast %19 : vector<1x16xf32> to vector<16xf32>
    %21 = vector.shape_cast %20 : vector<16xf32> to vector<1x1x16xf32>
    %22 = vector.broadcast %18 : vector<2x6x1xf32> to vector<2x6x16xf32>
    %23 = vector.broadcast %21 : vector<1x1x16xf32> to vector<2x6x16xf32>
    %24 = arith.mulf %22, %23 : vector<2x6x16xf32>
    %25 = arith.addf %16, %24 : vector<2x6x16xf32>
    %26 = vector.extract_strided_slice %0 {offsets = [0, 2], sizes = [2, 6], strides = [1, 1]} : vector<2x8xf32> to vector<2x6xf32>
    %27 = vector.shape_cast %26 : vector<2x6xf32> to vector<2x6x1xf32>
    %28 = vector.extract_strided_slice %1 {offsets = [2, 0], sizes = [1, 16], strides = [1, 1]} : vector<3x16xf32> to vector<1x16xf32>
    %29 = vector.shape_cast %28 : vector<1x16xf32> to vector<16xf32>
    %30 = vector.shape_cast %29 : vector<16xf32> to vector<1x1x16xf32>
    %31 = vector.broadcast %27 : vector<2x6x1xf32> to vector<2x6x16xf32>
    %32 = vector.broadcast %30 : vector<1x1x16xf32> to vector<2x6x16xf32>
    %33 = arith.mulf %31, %32 : vector<2x6x16xf32>
    %34 = arith.addf %25, %33 : vector<2x6x16xf32>
    %35 = vector.broadcast %8 : vector<1x1x16xf32> to vector<2x6x16xf32>
    %36 = arith.addf %34, %35 : vector<2x6x16xf32>
    %c0_13 = arith.constant 0 : index
    %c0_14 = arith.constant 0 : index
    %c0_15 = arith.constant 0 : index
    %37 = vector.load %arg9[%c0_13, %c0_14, %c0_15] : memref<2x8x16xf32, #tpu.memory_space<vmem>>, vector<2x1x16xf32>
    tpu.vector_store %arg9[%c0_13, %c0_14, %c0_15], %7 {strides = array<i32>} : memref<2x8x16xf32, #tpu.memory_space<vmem>>, vector<2x1x16xf32>,
    %c0_16 = arith.constant 0 : index
    %c7 = arith.constant 7 : index
    %c0_17 = arith.constant 0 : index
    %38 = vector.load %arg9[%c0_16, %c7, %c0_17] : memref<2x8x16xf32, #tpu.memory_space<vmem>>, vector<2x1x16xf32>
    tpu.vector_store %arg9[%c0_16, %c7, %c0_17], %7 {strides = array<i32>} : memref<2x8x16xf32, #tpu.memory_space<vmem>>, vector<2x1x16xf32>,
    %cst_18 = arith.constant 0.000000e+00 : f32
    %39 = vector.broadcast %cst_18 : f32 to vector<2x6x16xf32>
    %40 = arith.maximumf %36, %39 : vector<2x6x16xf32>
    %c0_19 = arith.constant 0 : index
    %c1 = arith.constant 1 : index
    %c0_20 = arith.constant 0 : index
    %41 = vector.load %arg9[%c0_19, %c1, %c0_20] : memref<2x8x16xf32, #tpu.memory_space<vmem>>, vector<2x6x16xf32>
    tpu.vector_store %arg9[%c0_19, %c1, %c0_20], %40 {strides = array<i32>} : memref<2x8x16xf32, #tpu.memory_space<vmem>>, vector<2x6x16xf32>,
    %c0_21 = arith.constant 0 : index
    %c0_22 = arith.constant 0 : index
    %c0_23 = arith.constant 0 : index
    %42 = vector.load %arg9[%c0_21, %c0_22, %c0_23] : memref<2x8x16xf32, #tpu.memory_space<vmem>>, vector<2x6x16xf32>
    %c0_24 = arith.constant 0 : index
    %c1_25 = arith.constant 1 : index
    %c0_26 = arith.constant 0 : index
    %43 = vector.load %arg9[%c0_24, %c1_25, %c0_26] : memref<2x8x16xf32, #tpu.memory_space<vmem>>, vector<2x6x16xf32>
    %c0_27 = arith.constant 0 : index
    %c2 = arith.constant 2 : index
    %c0_28 = arith.constant 0 : index
    %44 = vector.load %arg9[%c0_27, %c2, %c0_28] : memref<2x8x16xf32, #tpu.memory_space<vmem>>, vector<2x6x16xf32>
    %45 = tpu.concatenate %42, %43, %44 in 2 : vector<2x6x16xf32>, vector<2x6x16xf32>, vector<2x6x16xf32> -> vector<2x6x48xf32>
    %46 = vector.shape_cast %45 : vector<2x6x48xf32> to vector<12x48xf32>
    %cst_29 = arith.constant dense<0.000000e+00> : vector<12x16xf32>
    %47 = tpu.matmul %46, %3, %cst_29 {dimension_numbers = #tpu.dot_dimension_numbers<[1], [0], [0], [1], [0, 0, 1, 1], [], []>} : vector<12x48xf32>, vector<48x16xf32>, vector<12x16xf32> -> vector<12x16xf32>
    %48 = vector.broadcast %4 : vector<1x16xf32> to vector<12x16xf32>
    %49 = arith.addf %47, %48 : vector<12x16xf32>
    %50 = vector.shape_cast %49 : vector<12x16xf32> to vector<2x6x16xf32>
    %c0_30 = arith.constant 0 : index
    %c0_31 = arith.constant 0 : index
    %c0_32 = arith.constant 0 : index
    %51 = vector.load %arg9[%c0_30, %c0_31, %c0_32] : memref<2x8x16xf32, #tpu.memory_space<vmem>>, vector<2x1x16xf32>
    tpu.vector_store %arg9[%c0_30, %c0_31, %c0_32], %7 {strides = array<i32>} : memref<2x8x16xf32, #tpu.memory_space<vmem>>, vector<2x1x16xf32>,
    %c0_33 = arith.constant 0 : index
    %c7_34 = arith.constant 7 : index
    %c0_35 = arith.constant 0 : index
    %52 = vector.load %arg9[%c0_33, %c7_34, %c0_35] : memref<2x8x16xf32, #tpu.memory_space<vmem>>, vector<2x1x16xf32>
    tpu.vector_store %arg9[%c0_33, %c7_34, %c0_35], %7 {strides = array<i32>} : memref<2x8x16xf32, #tpu.memory_space<vmem>>, vector<2x1x16xf32>,
    %cst_36 = arith.constant 0.000000e+00 : f32
    %53 = vector.broadcast %cst_36 : f32 to vector<2x6x16xf32>
    %54 = arith.maximumf %50, %53 : vector<2x6x16xf32>
    %c0_37 = arith.constant 0 : index
    %c1_38 = arith.constant 1 : index
    %c0_39 = arith.constant 0 : index
    %55 = vector.load %arg9[%c0_37, %c1_38, %c0_39] : memref<2x8x16xf32, #tpu.memory_space<vmem>>, vector<2x6x16xf32>
    tpu.vector_store %arg9[%c0_37, %c1_38, %c0_39], %54 {strides = array<i32>} : memref<2x8x16xf32, #tpu.memory_space<vmem>>, vector<2x6x16xf32>,
    %c0_40 = arith.constant 0 : index
    %c0_41 = arith.constant 0 : index
    %c0_42 = arith.constant 0 : index
    %56 = vector.load %arg9[%c0_40, %c0_41, %c0_42] : memref<2x8x16xf32, #tpu.memory_space<vmem>>, vector<2x6x16xf32>
    %c0_43 = arith.constant 0 : index
    %c1_44 = arith.constant 1 : index
    %c0_45 = arith.constant 0 : index
    %57 = vector.load %arg9[%c0_43, %c1_44, %c0_45] : memref<2x8x16xf32, #tpu.memory_space<vmem>>, vector<2x6x16xf32>
    %c0_46 = arith.constant 0 : index
    %c2_47 = arith.constant 2 : index
    %c0_48 = arith.constant 0 : index
    %58 = vector.load %arg9[%c0_46, %c2_47, %c0_48] : memref<2x8x16xf32, #tpu.memory_space<vmem>>, vector<2x6x16xf32>
    %59 = tpu.concatenate %56, %57, %58 in 2 : vector<2x6x16xf32>, vector<2x6x16xf32>, vector<2x6x16xf32> -> vector<2x6x48xf32>
    %60 = vector.shape_cast %59 : vector<2x6x48xf32> to vector<12x48xf32>
    %cst_49 = arith.constant dense<0.000000e+00> : vector<12x16xf32>
    %61 = tpu.matmul %60, %3, %cst_49 {dimension_numbers = #tpu.dot_dimension_numbers<[1], [0], [0], [1], [0, 0, 1, 1], [], []>} : vector<12x48xf32>, vector<48x16xf32>, vector<12x16xf32> -> vector<12x16xf32>
    %62 = vector.broadcast %4 : vector<1x16xf32> to vector<12x16xf32>
    %63 = arith.addf %61, %62 : vector<12x16xf32>
    %64 = vector.shape_cast %63 : vector<12x16xf32> to vector<2x6x16xf32>
    %c0_50 = arith.constant 0 : index
    %c0_51 = arith.constant 0 : index
    %c0_52 = arith.constant 0 : index
    %65 = vector.load %arg9[%c0_50, %c0_51, %c0_52] : memref<2x8x16xf32, #tpu.memory_space<vmem>>, vector<2x6x16xf32>
    tpu.vector_store %arg9[%c0_50, %c0_51, %c0_52], %64 {strides = array<i32>} : memref<2x8x16xf32, #tpu.memory_space<vmem>>, vector<2x6x16xf32>,
    %c0_53 = arith.constant 0 : index
    %c6 = arith.constant 6 : index
    %c0_54 = arith.constant 0 : index
    %66 = vector.load %arg9[%c0_53, %c6, %c0_54] : memref<2x8x16xf32, #tpu.memory_space<vmem>>, vector<2x1x16xf32>
    tpu.vector_store %arg9[%c0_53, %c6, %c0_54], %7 {strides = array<i32>} : memref<2x8x16xf32, #tpu.memory_space<vmem>>, vector<2x1x16xf32>,
    %c0_55 = arith.constant 0 : index
    %c0_56 = arith.constant 0 : index
    %c0_57 = arith.constant 0 : index
    %67 = tpu.strided_load %arg9[%c0_55, %c0_56, %c0_57] {strides = array<i32: 1, 2, 1>} : memref<2x8x16xf32, #tpu.memory_space<vmem>>, vector<2x3x16xf32>
    %c0_58 = arith.constant 0 : index
    %c1_59 = arith.constant 1 : index
    %c0_60 = arith.constant 0 : index
    %68 = tpu.strided_load %arg9[%c0_58, %c1_59, %c0_60] {strides = array<i32: 1, 2, 1>} : memref<2x8x16xf32, #tpu.memory_space<vmem>>, vector<2x3x16xf32>
    %c0_61 = arith.constant 0 : index
    %c2_62 = arith.constant 2 : index
    %c0_63 = arith.constant 0 : index
    %69 = tpu.strided_load %arg9[%c0_61, %c2_62, %c0_63] {strides = array<i32: 1, 2, 1>} : memref<2x8x16xf32, #tpu.memory_space<vmem>>, vector<2x3x16xf32>
    %70 = arith.maximumf %68, %69 : vector<2x3x16xf32>
    %71 = arith.maximumf %67, %70 : vector<2x3x16xf32>
    %c0_64 = arith.constant 0 : index
    %c0_65 = arith.constant 0 : index
    %c0_66 = arith.constant 0 : index
    %72 = vector.load %arg9[%c0_64, %c0_65, %c0_66] : memref<2x8x16xf32, #tpu.memory_space<vmem>>, vector<2x1x16xf32>
    tpu.vector_store %arg9[%c0_64, %c0_65, %c0_66], %7 {strides = array<i32>} : memref<2x8x16xf32, #tpu.memory_space<vmem>>, vector<2x1x16xf32>,
    %c0_67 = arith.constant 0 : index
    %c4 = arith.constant 4 : index
    %c0_68 = arith.constant 0 : index
    %73 = vector.load %arg9[%c0_67, %c4, %c0_68] : memref<2x8x16xf32, #tpu.memory_space<vmem>>, vector<2x1x16xf32>
    tpu.vector_store %arg9[%c0_67, %c4, %c0_68], %7 {strides = array<i32>} : memref<2x8x16xf32, #tpu.memory_space<vmem>>, vector<2x1x16xf32>,
    %cst_69 = arith.constant 0.000000e+00 : f32
    %74 = vector.broadcast %cst_69 : f32 to vector<2x3x16xf32>
    %75 = arith.maximumf %71, %74 : vector<2x3x16xf32>
    %c0_70 = arith.constant 0 : index
    %c1_71 = arith.constant 1 : index
    %c0_72 = arith.constant 0 : index
    %76 = vector.load %arg9[%c0_70, %c1_71, %c0_72] : memref<2x8x16xf32, #tpu.memory_space<vmem>>, vector<2x3x16xf32>
    tpu.vector_store %arg9[%c0_70, %c1_71, %c0_72], %75 {strides = array<i32>} : memref<2x8x16xf32, #tpu.memory_space<vmem>>, vector<2x3x16xf32>,
    %c0_73 = arith.constant 0 : index
    %c0_74 = arith.constant 0 : index
    %c0_75 = arith.constant 0 : index
    %77 = vector.load %arg9[%c0_73, %c0_74, %c0_75] : memref<2x8x16xf32, #tpu.memory_space<vmem>>, vector<2x3x16xf32>
    %c0_76 = arith.constant 0 : index
    %c1_77 = arith.constant 1 : index
    %c0_78 = arith.constant 0 : index
    %78 = vector.load %arg9[%c0_76, %c1_77, %c0_78] : memref<2x8x16xf32, #tpu.memory_space<vmem>>, vector<2x3x16xf32>
    %c0_79 = arith.constant 0 : index
    %c2_80 = arith.constant 2 : index
    %c0_81 = arith.constant 0 : index
    %79 = vector.load %arg9[%c0_79, %c2_80, %c0_81] : memref<2x8x16xf32, #tpu.memory_space<vmem>>, vector<2x3x16xf32>
    %80 = tpu.concatenate %77, %78, %79 in 2 : vector<2x3x16xf32>, vector<2x3x16xf32>, vector<2x3x16xf32> -> vector<2x3x48xf32>
    %81 = vector.shape_cast %80 : vector<2x3x48xf32> to vector<6x48xf32>
    %cst_82 = arith.constant dense<0.000000e+00> : vector<6x16xf32>
    %82 = tpu.matmul %81, %3, %cst_82 {dimension_numbers = #tpu.dot_dimension_numbers<[1], [0], [0], [1], [0, 0, 1, 1], [], []>} : vector<6x48xf32>, vector<48x16xf32>, vector<6x16xf32> -> vector<6x16xf32>
    %83 = vector.broadcast %4 : vector<1x16xf32> to vector<6x16xf32>
    %84 = arith.addf %82, %83 : vector<6x16xf32>
    %85 = vector.shape_cast %84 : vector<6x16xf32> to vector<2x3x16xf32>
    %c0_83 = arith.constant 0 : index
    %c0_84 = arith.constant 0 : index
    %c0_85 = arith.constant 0 : index
    %86 = vector.load %arg9[%c0_83, %c0_84, %c0_85] : memref<2x8x16xf32, #tpu.memory_space<vmem>>, vector<2x1x16xf32>
    tpu.vector_store %arg9[%c0_83, %c0_84, %c0_85], %7 {strides = array<i32>} : memref<2x8x16xf32, #tpu.memory_space<vmem>>, vector<2x1x16xf32>,
    %c0_86 = arith.constant 0 : index
    %c4_87 = arith.constant 4 : index
    %c0_88 = arith.constant 0 : index
    %87 = vector.load %arg9[%c0_86, %c4_87, %c0_88] : memref<2x8x16xf32, #tpu.memory_space<vmem>>, vector<2x1x16xf32>
    tpu.vector_store %arg9[%c0_86, %c4_87, %c0_88], %7 {strides = array<i32>} : memref<2x8x16xf32, #tpu.memory_space<vmem>>, vector<2x1x16xf32>,
    %cst_89 = arith.constant 0.000000e+00 : f32
    %88 = vector.broadcast %cst_89 : f32 to vector<2x3x16xf32>
    %89 = arith.maximumf %85, %88 : vector<2x3x16xf32>
    %c0_90 = arith.constant 0 : index
    %c1_91 = arith.constant 1 : index
    %c0_92 = arith.constant 0 : index
    %90 = vector.load %arg9[%c0_90, %c1_91, %c0_92] : memref<2x8x16xf32, #tpu.memory_space<vmem>>, vector<2x3x16xf32>
    tpu.vector_store %arg9[%c0_90, %c1_91, %c0_92], %89 {strides = array<i32>} : memref<2x8x16xf32, #tpu.memory_space<vmem>>, vector<2x3x16xf32>,
    %c0_93 = arith.constant 0 : index
    %c0_94 = arith.constant 0 : index
    %c0_95 = arith.constant 0 : index
    %91 = vector.load %arg9[%c0_93, %c0_94, %c0_95] : memref<2x8x16xf32, #tpu.memory_space<vmem>>, vector<2x3x16xf32>
    %c0_96 = arith.constant 0 : index
    %c1_97 = arith.constant 1 : index
    %c0_98 = arith.constant 0 : index
    %92 = vector.load %arg9[%c0_96, %c1_97, %c0_98] : memref<2x8x16xf32, #tpu.memory_space<vmem>>, vector<2x3x16xf32>
    %c0_99 = arith.constant 0 : index
    %c2_100 = arith.constant 2 : index
    %c0_101 = arith.constant 0 : index
    %93 = vector.load %arg9[%c0_99, %c2_100, %c0_101] : memref<2x8x16xf32, #tpu.memory_space<vmem>>, vector<2x3x16xf32>
    %94 = tpu.concatenate %91, %92, %93 in 2 : vector<2x3x16xf32>, vector<2x3x16xf32>, vector<2x3x16xf32> -> vector<2x3x48xf32>
    %95 = vector.shape_cast %94 : vector<2x3x48xf32> to vector<6x48xf32>
    %cst_102 = arith.constant dense<0.000000e+00> : vector<6x16xf32>
    %96 = tpu.matmul %95, %3, %cst_102 {dimension_numbers = #tpu.dot_dimension_numbers<[1], [0], [0], [1], [0, 0, 1, 1], [], []>} : vector<6x48xf32>, vector<48x16xf32>, vector<6x16xf32> -> vector<6x16xf32>
    %97 = vector.broadcast %4 : vector<1x16xf32> to vector<6x16xf32>
    %98 = arith.addf %96, %97 : vector<6x16xf32>
    %99 = vector.shape_cast %98 : vector<6x16xf32> to vector<2x3x16xf32>
    %100 = arith.addf %99, %71 : vector<2x3x16xf32>
    %c0_103 = arith.constant 0 : index
    %c0_104 = arith.constant 0 : index
    %c0_105 = arith.constant 0 : index
    %101 = vector.load %arg9[%c0_103, %c0_104, %c0_105] : memref<2x8x16xf32, #tpu.memory_space<vmem>>, vector<2x3x16xf32>
    tpu.vector_store %arg9[%c0_103, %c0_104, %c0_105], %100 {strides = array<i32>} : memref<2x8x16xf32, #tpu.memory_space<vmem>>, vector<2x3x16xf32>,
    %c0_106 = arith.constant 0 : index
    %c3 = arith.constant 3 : index
    %c0_107 = arith.constant 0 : index
    %102 = vector.load %arg9[%c0_106, %c3, %c0_107] : memref<2x8x16xf32, #tpu.memory_space<vmem>>, vector<2x1x16xf32>
    tpu.vector_store %arg9[%c0_106, %c3, %c0_107], %7 {strides = array<i32>} : memref<2x8x16xf32, #tpu.memory_space<vmem>>, vector<2x1x16xf32>,
    %c0_108 = arith.constant 0 : index
    %c0_109 = arith.constant 0 : index
    %c0_110 = arith.constant 0 : index
    %103 = tpu.strided_load %arg9[%c0_108, %c0_109, %c0_110] {strides = array<i32: 1, 2, 1>} : memref<2x8x16xf32, #tpu.memory_space<vmem>>, vector<2x1x16xf32>
    %c0_111 = arith.constant 0 : index
    %c1_112 = arith.constant 1 : index
    %c0_113 = arith.constant 0 : index
    %104 = tpu.strided_load %arg9[%c0_111, %c1_112, %c0_113] {strides = array<i32: 1, 2, 1>} : memref<2x8x16xf32, #tpu.memory_space<vmem>>, vector<2x1x16xf32>
    %c0_114 = arith.constant 0 : index
    %c2_115 = arith.constant 2 : index
    %c0_116 = arith.constant 0 : index
    %105 = tpu.strided_load %arg9[%c0_114, %c2_115, %c0_116] {strides = array<i32: 1, 2, 1>} : memref<2x8x16xf32, #tpu.memory_space<vmem>>, vector<2x1x16xf32>
    %106 = arith.maximumf %104, %105 : vector<2x1x16xf32>
    %107 = arith.maximumf %103, %106 : vector<2x1x16xf32>
    %c0_117 = arith.constant 0 : index
    %c0_118 = arith.constant 0 : index
    %c0_119 = arith.constant 0 : index
    %108 = vector.load %arg9[%c0_117, %c0_118, %c0_119] : memref<2x8x16xf32, #tpu.memory_space<vmem>>, vector<2x1x16xf32>
    tpu.vector_store %arg9[%c0_117, %c0_118, %c0_119], %7 {strides = array<i32>} : memref<2x8x16xf32, #tpu.memory_space<vmem>>, vector<2x1x16xf32>,
    %c0_120 = arith.constant 0 : index
    %c2_121 = arith.constant 2 : index
    %c0_122 = arith.constant 0 : index
    %109 = vector.load %arg9[%c0_120, %c2_121, %c0_122] : memref<2x8x16xf32, #tpu.memory_space<vmem>>, vector<2x1x16xf32>
    tpu.vector_store %arg9[%c0_120, %c2_121, %c0_122], %7 {strides = array<i32>} : memref<2x8x16xf32, #tpu.memory_space<vmem>>, vector<2x1x16xf32>,
    %cst_123 = arith.constant 0.000000e+00 : f32
    %110 = vector.broadcast %cst_123 : f32 to vector<2x1x16xf32>
    %111 = arith.maximumf %107, %110 : vector<2x1x16xf32>
    %c0_124 = arith.constant 0 : index
    %c1_125 = arith.constant 1 : index
    %c0_126 = arith.constant 0 : index
    %112 = vector.load %arg9[%c0_124, %c1_125, %c0_126] : memref<2x8x16xf32, #tpu.memory_space<vmem>>, vector<2x1x16xf32>
    tpu.vector_store %arg9[%c0_124, %c1_125, %c0_126], %111 {strides = array<i32>} : memref<2x8x16xf32, #tpu.memory_space<vmem>>, vector<2x1x16xf32>,
    %c0_127 = arith.constant 0 : index
    %c0_128 = arith.constant 0 : index
    %c0_129 = arith.constant 0 : index
    %113 = vector.load %arg9[%c0_127, %c0_128, %c0_129] : memref<2x8x16xf32, #tpu.memory_space<vmem>>, vector<2x1x16xf32>
    %c0_130 = arith.constant 0 : index
    %c1_131 = arith.constant 1 : index
    %c0_132 = arith.constant 0 : index
    %114 = vector.load %arg9[%c0_130, %c1_131, %c0_132] : memref<2x8x16xf32, #tpu.memory_space<vmem>>, vector<2x1x16xf32>
    %c0_133 = arith.constant 0 : index
    %c2_134 = arith.constant 2 : index
    %c0_135 = arith.constant 0 : index
    %115 = vector.load %arg9[%c0_133, %c2_134, %c0_135] : memref<2x8x16xf32, #tpu.memory_space<vmem>>, vector<2x1x16xf32>
    %116 = tpu.concatenate %113, %114, %115 in 2 : vector<2x1x16xf32>, vector<2x1x16xf32>, vector<2x1x16xf32> -> vector<2x1x48xf32>
    %117 = vector.shape_cast %116 : vector<2x1x48xf32> to vector<2x48xf32>
    %cst_136 = arith.constant dense<0.000000e+00> : vector<2x16xf32>
    %118 = tpu.matmul %117, %3, %cst_136 {dimension_numbers = #tpu.dot_dimension_numbers<[1], [0], [0], [1], [0, 0, 1, 1], [], []>} : vector<2x48xf32>, vector<48x16xf32>, vector<2x16xf32> -> vector<2x16xf32>
    %119 = vector.broadcast %4 : vector<1x16xf32> to vector<2x16xf32>
    %120 = arith.addf %118, %119 : vector<2x16xf32>
    %121 = vector.shape_cast %120 : vector<2x16xf32> to vector<2x1x16xf32>
    %c0_137 = arith.constant 0 : index
    %c0_138 = arith.constant 0 : index
    %c0_139 = arith.constant 0 : index
    %122 = vector.load %arg9[%c0_137, %c0_138, %c0_139] : memref<2x8x16xf32, #tpu.memory_space<vmem>>, vector<2x1x16xf32>
    tpu.vector_store %arg9[%c0_137, %c0_138, %c0_139], %7 {strides = array<i32>} : memref<2x8x16xf32, #tpu.memory_space<vmem>>, vector<2x1x16xf32>,
    %c0_140 = arith.constant 0 : index
    %c2_141 = arith.constant 2 : index
    %c0_142 = arith.constant 0 : index
    %123 = vector.load %arg9[%c0_140, %c2_141, %c0_142] : memref<2x8x16xf32, #tpu.memory_space<vmem>>, vector<2x1x16xf32>
    tpu.vector_store %arg9[%c0_140, %c2_141, %c0_142], %7 {strides = array<i32>} : memref<2x8x16xf32, #tpu.memory_space<vmem>>, vector<2x1x16xf32>,
    %cst_143 = arith.constant 0.000000e+00 : f32
    %124 = vector.broadcast %cst_143 : f32 to vector<2x1x16xf32>
    %125 = arith.maximumf %121, %124 : vector<2x1x16xf32>
    %c0_144 = arith.constant 0 : index
    %c1_145 = arith.constant 1 : index
    %c0_146 = arith.constant 0 : index
    %126 = vector.load %arg9[%c0_144, %c1_145, %c0_146] : memref<2x8x16xf32, #tpu.memory_space<vmem>>, vector<2x1x16xf32>
    tpu.vector_store %arg9[%c0_144, %c1_145, %c0_146], %125 {strides = array<i32>} : memref<2x8x16xf32, #tpu.memory_space<vmem>>, vector<2x1x16xf32>,
    %c0_147 = arith.constant 0 : index
    %c0_148 = arith.constant 0 : index
    %c0_149 = arith.constant 0 : index
    %127 = vector.load %arg9[%c0_147, %c0_148, %c0_149] : memref<2x8x16xf32, #tpu.memory_space<vmem>>, vector<2x1x16xf32>
    %c0_150 = arith.constant 0 : index
    %c1_151 = arith.constant 1 : index
    %c0_152 = arith.constant 0 : index
    %128 = vector.load %arg9[%c0_150, %c1_151, %c0_152] : memref<2x8x16xf32, #tpu.memory_space<vmem>>, vector<2x1x16xf32>
    %c0_153 = arith.constant 0 : index
    %c2_154 = arith.constant 2 : index
    %c0_155 = arith.constant 0 : index
    %129 = vector.load %arg9[%c0_153, %c2_154, %c0_155] : memref<2x8x16xf32, #tpu.memory_space<vmem>>, vector<2x1x16xf32>
    %130 = tpu.concatenate %127, %128, %129 in 2 : vector<2x1x16xf32>, vector<2x1x16xf32>, vector<2x1x16xf32> -> vector<2x1x48xf32>
    %131 = vector.shape_cast %130 : vector<2x1x48xf32> to vector<2x48xf32>
    %cst_156 = arith.constant dense<0.000000e+00> : vector<2x16xf32>
    %132 = tpu.matmul %131, %3, %cst_156 {dimension_numbers = #tpu.dot_dimension_numbers<[1], [0], [0], [1], [0, 0, 1, 1], [], []>} : vector<2x48xf32>, vector<48x16xf32>, vector<2x16xf32> -> vector<2x16xf32>
    %133 = vector.broadcast %4 : vector<1x16xf32> to vector<2x16xf32>
    %134 = arith.addf %132, %133 : vector<2x16xf32>
    %135 = vector.shape_cast %134 : vector<2x16xf32> to vector<2x1x16xf32>
    %136 = arith.addf %135, %107 : vector<2x1x16xf32>
    %137 = vector.shape_cast %136 : vector<2x1x16xf32> to vector<2x16xf32>
    %cst_157 = arith.constant dense<0.000000e+00> : vector<2x4xf32>
    %138 = tpu.matmul %137, %5, %cst_157 {dimension_numbers = #tpu.dot_dimension_numbers<[1], [0], [0], [1], [0, 0, 1, 1], [], []>} : vector<2x16xf32>, vector<16x4xf32>, vector<2x4xf32> -> vector<2x4xf32>
    %139 = vector.broadcast %6 : vector<1x4xf32> to vector<2x4xf32>
    %140 = arith.addf %138, %139 : vector<2x4xf32>
    %c0_158 = arith.constant 0 : index
    %c0_159 = arith.constant 0 : index
    %141 = vector.load %arg8[%c0_158, %c0_159] : memref<2x4xf32, #tpu.memory_space<vmem>>, vector<2x4xf32>
    tpu.vector_store %arg8[%c0_158, %c0_159], %140 {strides = array<i32>} : memref<2x4xf32, #tpu.memory_space<vmem>>, vector<2x4xf32>,
    return
  }
  func.func @transform_0(%arg0: i32) -> (i32, i32) {
    %c0_i32 = arith.constant 0 : i32
    %c0_i32_0 = arith.constant 0 : i32
    return %arg0, %c0_i32 : i32, i32
  }
  func.func @transform_1(%arg0: i32) -> (i32, i32) {
    %c0_i32 = arith.constant 0 : i32
    %c0_i32_0 = arith.constant 0 : i32
    %c0_i32_1 = arith.constant 0 : i32
    return %c0_i32, %c0_i32_0 : i32, i32
  }
  func.func @transform_2(%arg0: i32) -> (i32, i32) {
    %c0_i32 = arith.constant 0 : i32
    %c0_i32_0 = arith.constant 0 : i32
    %c0_i32_1 = arith.constant 0 : i32
    return %c0_i32, %c0_i32_0 : i32, i32
  }
  func.func @transform_3(%arg0: i32) -> (i32, i32) {
    %c0_i32 = arith.constant 0 : i32
    %c0_i32_0 = arith.constant 0 : i32
    %c0_i32_1 = arith.constant 0 : i32
    return %c0_i32, %c0_i32_0 : i32, i32
  }
  func.func @transform_4(%arg0: i32) -> (i32, i32) {
    %c0_i32 = arith.constant 0 : i32
    %c0_i32_0 = arith.constant 0 : i32
    %c0_i32_1 = arith.constant 0 : i32
    return %c0_i32, %c0_i32_0 : i32, i32
  }
  func.func @transform_5(%arg0: i32) -> (i32, i32) {
    %c0_i32 = arith.constant 0 : i32
    %c0_i32_0 = arith.constant 0 : i32
    %c0_i32_1 = arith.constant 0 : i32
    return %c0_i32, %c0_i32_0 : i32, i32
  }
  func.func @transform_6(%arg0: i32) -> (i32, i32) {
    %c0_i32 = arith.constant 0 : i32
    %c0_i32_0 = arith.constant 0 : i32
    %c0_i32_1 = arith.constant 0 : i32
    return %c0_i32, %c0_i32_0 : i32, i32
  }
  func.func @transform_7(%arg0: i32) -> (i32, i32) {
    %c0_i32 = arith.constant 0 : i32
    %c0_i32_0 = arith.constant 0 : i32
    return %arg0, %c0_i32 : i32, i32
  }
}

</mosaic_0001>

<llo_original>
// kernel: tpu_custom_call.1
$region0: #{tpu_custom_call.1}
  #allocation0 [shape = 'u32[]', space=smem, size = 0x4, offset = 0x4, fixed_abs, tag = 'smem constant byte address 0x4 - core index']
  #allocation1 [shape = 'u32[144,128]{1,0:T(1,128)}', space=vmem, size = 0x12000, scoped, tag = 'internal scratch']
  #allocation2 [shape = 'f32[2,8,16]{2,1,0:T(8,128)}', space=vmem, size = 0x2000, scoped, tag = 'scratch operand']
  %s0 = inlined_call_operand.vmem [shape: f32[2,8], index: 0, kind: input, shape index: {}]
  %s1 = inlined_call_operand.vmem [shape: f32[3,16], index: 1, kind: input, shape index: {}]
  %s2 = inlined_call_operand.vmem [shape: f32[1,16], index: 2, kind: input, shape index: {}]
  %s3 = inlined_call_operand.vmem [shape: f32[48,16], index: 3, kind: input, shape index: {}]
  %s4 = inlined_call_operand.vmem [shape: f32[1,16], index: 4, kind: input, shape index: {}]
  %s5 = inlined_call_operand.vmem [shape: f32[16,4], index: 5, kind: input, shape index: {}]
  %s6 = inlined_call_operand.vmem [shape: f32[1,4], index: 6, kind: input, shape index: {}]
  %s7 = inlined_call_operand.hbm [shape: f32[2,4], index: 7, kind: output, shape index: {}]
  %s8 = sld [smem:[#allocation0]]
  $region38: #{tpu_custom_call.1} parent=0
    _
  %s10 = ssub.s32 1, %s8
  %s11 = scalar_select 0, %s10, %s8
  $region1: #{tpu_custom_call.1} parent=0
    #allocation3 [shape = 'u8[1024]{0}', space=vmem, size = 0x400, scoped, tag = 'output window, operand 0, single buffered']
    #allocation4 [shape = 's32[1]{0}', space=sflag, size = 0x4, scoped, tag = 'scoped memory for tpu_custom_call.1']
    %12 = vsyncpa [#allocation4], 0
    // Predicated region
    $region2: #{tpu_custom_call.1} parent=1 // pred_check
      _
    $region3: #{tpu_custom_call.1} parent=1 // pred_check_branch
      %14 = sbr.rel (0) target = $region5
    $region4: #{tpu_custom_call.1} parent=1 // pred_region
      _
    $region5: #{tpu_custom_call.1} parent=1 // pred_fallthru
      _
    // Predicated region
    $region6: #{tpu_custom_call.1} parent=1 // pred_check
      _
    $region7: #{tpu_custom_call.1} parent=1 // pred_check_branch
      %16 = sbr.rel (0) target = $region9
    $region8: #{tpu_custom_call.1} parent=1 // pred_region
      _
    $region9: #{tpu_custom_call.1} parent=1 // pred_fallthru
      _
    // Predicated region
    $region10: #{tpu_custom_call.1} parent=1 // pred_check
      _
    $region11: #{tpu_custom_call.1} parent=1 // pred_check_branch
      %18 = sbr.rel (0) target = $region13
    $region12: #{tpu_custom_call.1} parent=1 // pred_region
      _
    $region13: #{tpu_custom_call.1} parent=1 // pred_fallthru
      _
    // Predicated region
    $region14: #{tpu_custom_call.1} parent=1 // pred_check
      _
    $region15: #{tpu_custom_call.1} parent=1 // pred_check_branch
      %20 = sbr.rel (0) target = $region17
    $region16: #{tpu_custom_call.1} parent=1 // pred_region
      _
    $region17: #{tpu_custom_call.1} parent=1 // pred_fallthru
      _
    // Predicated region
    $region18: #{tpu_custom_call.1} parent=1 // pred_check
      _
    $region19: #{tpu_custom_call.1} parent=1 // pred_check_branch
      %22 = sbr.rel (0) target = $region21
    $region20: #{tpu_custom_call.1} parent=1 // pred_region
      _
    $region21: #{tpu_custom_call.1} parent=1 // pred_fallthru
      _
    // Predicated region
    $region22: #{tpu_custom_call.1} parent=1 // pred_check
      _
    $region23: #{tpu_custom_call.1} parent=1 // pred_check_branch
      %24 = sbr.rel (0) target = $region25
    $region24: #{tpu_custom_call.1} parent=1 // pred_region
      _
    $region25: #{tpu_custom_call.1} parent=1 // pred_fallthru
      _
    // Predicated region
    $region26: #{tpu_custom_call.1} parent=1 // pred_check
      _
    $region27: #{tpu_custom_call.1} parent=1 // pred_check_branch
      %26 = sbr.rel (0) target = $region29
    $region28: #{tpu_custom_call.1} parent=1 // pred_region
      _
    $region29: #{tpu_custom_call.1} parent=1 // pred_fallthru
      _
    %v27 = vld [vmem:[%s0] sm:$0x3]
    %v28 = vld [vmem:[%s1] sm:$0x7]
    %v29 = vld [vmem:[%s2] sm:$0x1]
    %v30 = vld [vmem:[%s3] sm:$0xff]
    %v31 = vld [vmem:[%s3 + $0x8] sm:$0xff]
    %v32 = vld [vmem:[%s3 + $0x10] sm:$0xff]
    %v33 = vld [vmem:[%s3 + $0x18] sm:$0xff]
    %v34 = vld [vmem:[%s3 + $0x20] sm:$0xff]
    %v35 = vld [vmem:[%s3 + $0x28] sm:$0xff]
    %v36 = vld [vmem:[%s4] sm:$0x1]
    %v37 = vld [vmem:[%s5] sm:$0xff]
    %v38 = vld [vmem:[%s5 + $0x8] sm:$0xff]
    %v39 = vld [vmem:[%s6] sm:$0x1]
    %v40 = vlaneseq
    %v41 = vshrl.u32 %v40, 7
    %v42 = vsub.s32 0, %v41
    %v43 = vrot.slane %v27, %v42
    %45 = vbcast.lane.b32.xlu0 %v43, 256
    %v46 = vpop.permute.xlu0 %45
    %v47 = vlaneseq
    %v48 = vshrl.u32 %v47, 7
    %v49 = vsub.s32 1, %v48
    %v50 = vrot.slane %v27, %v49
    %52 = vbcast.lane.b32.xlu0 %v50, 256
    %v53 = vpop.permute.xlu0 %52
    %v54 = vlaneseq
    %v55 = vshrl.u32 %v54, 7
    %v56 = vsub.s32 0, %v55
    %v57 = vrot.slane %v28, %v56
    %v58 = vmul.f32 %v46, %v57
    %v59 = vmul.f32 %v53, %v57
    %s61 = sor.u32 256, 1
    %62 = vbcast.lane.b32.xlu0 %v43, %s61
    %v63 = vpop.permute.xlu0 %62
    %s65 = sor.u32 256, 1
    %66 = vbcast.lane.b32.xlu0 %v50, %s65
    %v67 = vpop.permute.xlu0 %66
    %v68 = vlaneseq
    %v69 = vshrl.u32 %v68, 7
    %v70 = vsub.s32 1, %v69
    %v71 = vrot.slane %v28, %v70
    %v72 = vmul.f32 %v63, %v71
    %v73 = vmul.f32 %v67, %v71
    %v74 = vadd.f32 %v58, %v72
    %v75 = vadd.f32 %v59, %v73
    %s77 = sor.u32 256, 2
    %78 = vbcast.lane.b32.xlu0 %v43, %s77
    %v79 = vpop.permute.xlu0 %78
    %s81 = sor.u32 256, 2
    %82 = vbcast.lane.b32.xlu0 %v50, %s81
    %v83 = vpop.permute.xlu0 %82
    %v84 = vlaneseq
    %v85 = vshrl.u32 %v84, 7
    %v86 = vsub.s32 2, %v85
    %v87 = vrot.slane %v28, %v86
    %v88 = vmul.f32 %v79, %v87
    %v89 = vmul.f32 %v83, %v87
    %v90 = vadd.f32 %v74, %v88
    %v91 = vadd.f32 %v75, %v89
    %v93 = vlaneseq
    %v94 = vshrl.u32 %v93, 7
    %v95 = vsub.s32 0, %v94
    %v96 = vrot.slane %v29, %v95
    %v98 = vadd.f32 %v90, %v96
    %v99 = vadd.f32 %v91, %v96
    %vm100 = vcmask 122880
    %101 = vst.msk [vmem:[#allocation2] sm:$0x1] %vm100, 0.0
    %102 = vst.msk [vmem:[#allocation2 + $0x8] sm:$0x1] %vm100, 0.0
    %103 = vst.msk [vmem:[#allocation2 + $0x7] sm:$0x1] %vm100, 0.0
    %104 = vst.msk [vmem:[#allocation2 + $0xf] sm:$0x1] %vm100, 0.0
    %v105 = vmax.f32 %v98, 0.0
    %v106 = vmax.f32 %v99, 0.0
    %vm107 = vcmask 128000
    %108 = vst.msk [vmem:[#allocation2 + $0x1] sm:$0x3f] %vm107, %v105
    %109 = vst.msk [vmem:[#allocation2 + $0x9] sm:$0x3f] %vm107, %v106
    %v110 = vld [vmem:[#allocation2] sm:$0x3f]
    %v111 = vld [vmem:[#allocation2 + $0x8] sm:$0x3f]
    %v112 = vld [vmem:[#allocation2 + $0x1] sm:$0x3f]
    %v113 = vld [vmem:[#allocation2 + $0x9] sm:$0x3f]
    %v114 = vld [vmem:[#allocation2 + $0x2] sm:$0x3f]
    %v115 = vld [vmem:[#allocation2 + $0xa] sm:$0x3f]
    %118 = vrot.lane.b32.xlu0 %v112, 16
    %v119 = vpop.permute.xlu0 %118
    %120 = vrot.lane.b32.xlu0 %v113, 16
    %v121 = vpop.permute.xlu0 %120
    %126 = vrot.lane.b32.xlu0 %v114, 32
    %v127 = vpop.permute.xlu0 %126
    %128 = vrot.lane.b32.xlu0 %v115, 32
    %v129 = vpop.permute.xlu0 %128
    %vm132 = vcmask 130048
    %v133 = vsel %vm132, %v110, %v119
    %v134 = vsel %vm132, %v111, %v121
    %vm135 = vcmask 261120
    %v136 = vsel %vm135, %v133, %v127
    %v137 = vsel %vm135, %v134, %v129
    %v140 = vcombine.high %v136, %v136
    %v142 = vunpack.c.l.s4 1983009808
    %v143 = vunpack.c.0.s8 %v142
    %v144 = vlaneseq
    %v145 = vshrl.u32 %v144, 7
    %v146 = vsub.s32 %v143, %v145
    %v147 = vrot.slane %v136, %v146
    %v149 = vunpack.c.l.s4 1983009808
    %v150 = vunpack.c.0.s8 %v149
    %v151 = vlaneseq
    %v152 = vshrl.u32 %v151, 7
    %v153 = vsub.s32 %v150, %v152
    %v154 = vrot.slane %v140, %v153
    %v155 = vcombine.high %v147, %v147
    %v156 = vcombine.high %v137, %v137
    %v158 = vunpack.c.l.s4 1983009808
    %v159 = vunpack.c.0.s8 %v158
    %v160 = vlaneseq
    %v161 = vshrl.u32 %v160, 7
    %v162 = vsub.s32 %v159, %v161
    %v163 = vrot.slane %v137, %v162
    %v165 = vunpack.c.l.s4 1983009808
    %v166 = vunpack.c.0.s8 %v165
    %v167 = vlaneseq
    %v168 = vshrl.u32 %v167, 7
    %v169 = vsub.s32 %v166, %v168
    %v170 = vrot.slane %v156, %v169
    %v171 = vcombine.high %v163, %v163
    %v173 = vlaneseq
    %v174 = vshrl.u32 %v173, 7
    %v175 = vsub.s32 0, %v174
    %v176 = vrot.slane %v36, %v175
    %v178 = vcombine.low %v147, %v155
    %v179 = vcombine.low %v154, %v163
    %v181 = vunpack.c.l.s4 1983009808
    %v182 = vunpack.c.0.s8 %v181
    %v183 = vlaneseq
    %v184 = vshrl.u32 %v183, 7
    %v185 = vsub.s32 %v182, %v184
    %v186 = vrot.slane %v178, %v185
    %v188 = vunpack.c.l.s4 1983009808
    %v189 = vunpack.c.0.s8 %v188
    %v190 = vlaneseq
    %v191 = vshrl.u32 %v190, 7
    %v192 = vsub.s32 %v189, %v191
    %v193 = vrot.slane %v179, %v192
    %v194 = vcombine.low %v186, %v193
    %v195 = vcombine.low %v171, %v170
    %v197 = vunpack.c.l.s4 1983009808
    %v198 = vunpack.c.0.s8 %v197
    %v199 = vlaneseq
    %v200 = vshrl.u32 %v199, 7
    %v201 = vsub.s32 %v198, %v200
    %v202 = vrot.slane %v195, %v201
    %vm203 = vcmask 392192
    %v204 = vsel %vm203, %v194, 0
    %v206 = vsel %vm203, %v202, 0
    %208 = vmatprep.subr.mxu0 0.0
    %209 = vmatpush1.msra.mxu0 0.0
    %210 = vmatprep.subr.mxu0 0.0
    %211 = vmatpush1.msra.mxu0 0.0
    %212 = vmatprep.subr.mxu0 0.0
    %213 = vmatpush1.msra.mxu0 0.0
    %214 = vmatprep.subr.mxu0 0.0
    %215 = vmatpush1.msra.mxu0 0.0
    %216 = vmatprep.subr.mxu0 0.0
    %217 = vmatpush1.msra.mxu0 0.0
    %218 = vmatprep.subr.mxu0 0.0
    %219 = vmatpush1.msra.mxu0 0.0
    %220 = vmatprep.subr.mxu0 0.0
    %221 = vmatpush1.msra.mxu0 0.0
    %222 = vmatprep.subr.mxu0 0.0
    %223 = vmatpush1.msra.mxu0 0.0
    %224 = vmatprep.subr.mxu0 0.0
    %225 = vmatpush1.msra.mxu0 0.0
    %226 = vmatprep.subr.mxu0 0.0
    %227 = vmatpush1.msra.mxu0 0.0
    %228 = vmatprep.subr.mxu0 0.0
    %229 = vmatpush1.msra.mxu0 %v35
    %230 = vmatprep.subr.mxu0 0.0
    %231 = vmatpush1.msra.mxu0 %v34
    %232 = vmatprep.subr.mxu0 0.0
    %233 = vmatpush1.msra.mxu0 %v33
    %234 = vmatprep.subr.mxu0 0.0
    %235 = vmatpush1.msra.mxu0 %v32
    %236 = vmatprep.subr.mxu0 0.0
    %237 = vmatpush1.msra.mxu0 %v31
    %238 = vmatprep.subr.mxu0 0.0
    %239 = vmatpush1.msra.mxu0 %v30
    %240 = vmatprep.subr.mxu0 0.0
    %241 = vmatpush2.msra.mxu0 0.0
    %242 = vmatprep.subr.mxu0 0.0
    %243 = vmatpush2.msra.mxu0 0.0
    %244 = vmatprep.subr.mxu0 0.0
    %245 = vmatpush2.msra.mxu0 0.0
    %246 = vmatprep.subr.mxu0 0.0
    %247 = vmatpush2.msra.mxu0 0.0
    %248 = vmatprep.subr.mxu0 0.0
    %249 = vmatpush2.msra.mxu0 0.0
    %250 = vmatprep.subr.mxu0 0.0
    %251 = vmatpush2.msra.mxu0 0.0
    %252 = vmatprep.subr.mxu0 0.0
    %253 = vmatpush2.msra.mxu0 0.0
    %254 = vmatprep.subr.mxu0 0.0
    %255 = vmatpush2.msra.mxu0 0.0
    %256 = vmatprep.subr.mxu0 0.0
    %257 = vmatpush2.msra.mxu0 0.0
    %258 = vmatprep.subr.mxu0 0.0
    %259 = vmatpush2.msra.mxu0 0.0
    %260 = vmatprep.subr.mxu0 0.0
    %261 = vmatpush2.msra.mxu0 0.0
    %262 = vmatprep.subr.mxu0 0.0
    %263 = vmatpush2.msra.mxu0 0.0
    %264 = vmatprep.subr.mxu0 0.0
    %265 = vmatpush2.msra.mxu0 0.0
    %266 = vmatprep.subr.mxu0 0.0
    %267 = vmatpush2.msra.mxu0 0.0
    %268 = vmatprep.subr.mxu0 0.0
    %269 = vmatpush2.msra.mxu0 0.0
    %270 = vmatprep.subr.mxu0 0.0
    %271 = vmatpush2.msra.mxu0 0.0
    %272 = vmatprep.mubr.f32.mxu0 0.0
    %273 = vmatmul.mubr.f32.gmra.mxu0 %v204
    %v274 = vpop.f32.mrf.mxu0
    %v275 = vadd.f32 %v176, %v274
    %v276 = vpop.f32.mrf.mxu0
    %277 = vmatprep.mubr.f32.mxu0 0.0
    %278 = vmatmul.mubr.f32.gmra.mxu0 %v206
    %v279 = vpop.f32.mrf.mxu0
    %v280 = vadd.f32 %v176, %v279
    %v281 = vpop.f32.mrf.mxu0
    %282 = vdwg.mxu0
    %v285 = vcombine.high %v275, %v275
    %v287 = vunpack.c.l.s4 1983009808
    %v288 = vunpack.c.0.s8 %v287
    %v289 = vlaneseq
    %v290 = vshrl.u32 %v289, 7
    %v291 = vsub.s32 %v288, %v290
    %v292 = vrot.slane %v275, %v291
    %v294 = vunpack.c.l.s4 1983009808
    %v295 = vunpack.c.0.s8 %v294
    %v296 = vlaneseq
    %v297 = vshrl.u32 %v296, 7
    %v298 = vsub.s32 %v295, %v297
    %v299 = vrot.slane %v285, %v298
    %v300 = vcombine.high %v292, %v292
    %v301 = vcombine.high %v299, %v299
    %v303 = vunpack.c.l.s4 1983009808
    %v304 = vunpack.c.0.s8 %v303
    %v305 = vlaneseq
    %v306 = vshrl.u32 %v305, 7
    %v307 = vsub.s32 %v304, %v306
    %v308 = vrot.slane %v280, %v307
    %v309 = vcombine.high %v308, %v308
    %316 = vst.msk [vmem:[#allocation2] sm:$0x1] %vm100, 0.0
    %317 = vst.msk [vmem:[#allocation2 + $0x8] sm:$0x1] %vm100, 0.0
    %318 = vst.msk [vmem:[#allocation2 + $0x7] sm:$0x1] %vm100, 0.0
    %319 = vst.msk [vmem:[#allocation2 + $0xf] sm:$0x1] %vm100, 0.0
    %v320 = vmax.f32 %v292, 0.0
    %v321 = vmax.f32 %v300, 0.0
    %v322 = vmax.f32 %v299, 0.0
    %v323 = vmax.f32 %v301, 0.0
    %v324 = vmax.f32 %v308, 0.0
    %v325 = vmax.f32 %v309, 0.0
    %v332 = vcombine.low %v320, %v321
    %v334 = vunpack.c.l.s4 1983009808
    %v335 = vunpack.c.0.s8 %v334
    %v336 = vlaneseq
    %v337 = vshrl.u32 %v336, 7
    %v338 = vsub.s32 %v335, %v337
    %v339 = vrot.slane %v332, %v338
    %v341 = vunpack.c.l.s4 1983009808
    %v342 = vunpack.c.0.s8 %v341
    %v343 = vlaneseq
    %v344 = vshrl.u32 %v343, 7
    %v345 = vsub.s32 %v342, %v344
    %v346 = vrot.slane %v322, %v345
    %v347 = vcombine.low %v339, %v346
    %v348 = vcombine.low %v323, %v324
    %v350 = vunpack.c.l.s4 1983009808
    %v351 = vunpack.c.0.s8 %v350
    %v352 = vlaneseq
    %v353 = vshrl.u32 %v352, 7
    %v354 = vsub.s32 %v351, %v353
    %v355 = vrot.slane %v348, %v354
    %v357 = vunpack.c.l.s4 1983009808
    %v358 = vunpack.c.0.s8 %v357
    %v359 = vlaneseq
    %v360 = vshrl.u32 %v359, 7
    %v361 = vsub.s32 %v358, %v360
    %v362 = vrot.slane %v325, %v361
    %v363 = vcombine.low %v355, %v362
    %366 = vst.msk [vmem:[#allocation2 + $0x1] sm:$0x3f] %vm107, %v347
    %367 = vst.msk [vmem:[#allocation2 + $0x9] sm:$0x3f] %vm107, %v363
    %v368 = vld [vmem:[#allocation2] sm:$0x3f]
    %v369 = vld [vmem:[#allocation2 + $0x8] sm:$0x3f]
    %v370 = vld [vmem:[#allocation2 + $0x1] sm:$0x3f]
    %v371 = vld [vmem:[#allocation2 + $0x9] sm:$0x3f]
    %v372 = vld [vmem:[#allocation2 + $0x2] sm:$0x3f]
    %v373 = vld [vmem:[#allocation2 + $0xa] sm:$0x3f]
    %376 = vrot.lane.b32.xlu0 %v370, 16
    %v377 = vpop.permute.xlu0 %376
    %378 = vrot.lane.b32.xlu0 %v371, 16
    %v379 = vpop.permute.xlu0 %378
    %384 = vrot.lane.b32.xlu0 %v372, 32
    %v385 = vpop.permute.xlu0 %384
    %386 = vrot.lane.b32.xlu0 %v373, 32
    %v387 = vpop.permute.xlu0 %386
    %v390 = vsel %vm132, %v368, %v377
    %v391 = vsel %vm132, %v369, %v379
    %v392 = vsel %vm135, %v390, %v385
    %v393 = vsel %vm135, %v391, %v387
    %v396 = vcombine.high %v392, %v392
    %v398 = vunpack.c.l.s4 1983009808
    %v399 = vunpack.c.0.s8 %v398
    %v400 = vlaneseq
    %v401 = vshrl.u32 %v400, 7
    %v402 = vsub.s32 %v399, %v401
    %v403 = vrot.slane %v392, %v402
    %v405 = vunpack.c.l.s4 1983009808
    %v406 = vunpack.c.0.s8 %v405
    %v407 = vlaneseq
    %v408 = vshrl.u32 %v407, 7
    %v409 = vsub.s32 %v406, %v408
    %v410 = vrot.slane %v396, %v409
    %v411 = vcombine.high %v403, %v403
    %v412 = vcombine.high %v393, %v393
    %v414 = vunpack.c.l.s4 1983009808
    %v415 = vunpack.c.0.s8 %v414
    %v416 = vlaneseq
    %v417 = vshrl.u32 %v416, 7
    %v418 = vsub.s32 %v415, %v417
    %v419 = vrot.slane %v393, %v418
    %v421 = vunpack.c.l.s4 1983009808
    %v422 = vunpack.c.0.s8 %v421
    %v423 = vlaneseq
    %v424 = vshrl.u32 %v423, 7
    %v425 = vsub.s32 %v422, %v424
    %v426 = vrot.slane %v412, %v425
    %v427 = vcombine.high %v419, %v419
    %v428 = vcombine.low %v403, %v411
    %v429 = vcombine.low %v410, %v419
    %v431 = vunpack.c.l.s4 1983009808
    %v432 = vunpack.c.0.s8 %v431
    %v433 = vlaneseq
    %v434 = vshrl.u32 %v433, 7
    %v435 = vsub.s32 %v432, %v434
    %v436 = vrot.slane %v428, %v435
    %v438 = vunpack.c.l.s4 1983009808
    %v439 = vunpack.c.0.s8 %v438
    %v440 = vlaneseq
    %v441 = vshrl.u32 %v440, 7
    %v442 = vsub.s32 %v439, %v441
    %v443 = vrot.slane %v429, %v442
    %v444 = vcombine.low %v436, %v443
    %v445 = vcombine.low %v427, %v426
    %v447 = vunpack.c.l.s4 1983009808
    %v448 = vunpack.c.0.s8 %v447
    %v449 = vlaneseq
    %v450 = vshrl.u32 %v449, 7
    %v451 = vsub.s32 %v448, %v450
    %v452 = vrot.slane %v445, %v451
    %v453 = vsel %vm203, %v444, 0
    %v455 = vsel %vm203, %v452, 0
    %457 = vmatprep.subr.mxu0 0.0
    %458 = vmatpush1.msra.mxu0 0.0
    %459 = vmatprep.subr.mxu0 0.0
    %460 = vmatpush1.msra.mxu0 0.0
    %461 = vmatprep.subr.mxu0 0.0
    %462 = vmatpush1.msra.mxu0 0.0
    %463 = vmatprep.subr.mxu0 0.0
    %464 = vmatpush1.msra.mxu0 0.0
    %465 = vmatprep.subr.mxu0 0.0
    %466 = vmatpush1.msra.mxu0 0.0
    %467 = vmatprep.subr.mxu0 0.0
    %468 = vmatpush1.msra.mxu0 0.0
    %469 = vmatprep.subr.mxu0 0.0
    %470 = vmatpush1.msra.mxu0 0.0
    %471 = vmatprep.subr.mxu0 0.0
    %472 = vmatpush1.msra.mxu0 0.0
    %473 = vmatprep.subr.mxu0 0.0
    %474 = vmatpush1.msra.mxu0 0.0
    %475 = vmatprep.subr.mxu0 0.0
    %476 = vmatpush1.msra.mxu0 0.0
    %477 = vmatprep.subr.mxu0 0.0
    %478 = vmatpush1.msra.mxu0 %v35
    %479 = vmatprep.subr.mxu0 0.0
    %480 = vmatpush1.msra.mxu0 %v34
    %481 = vmatprep.subr.mxu0 0.0
    %482 = vmatpush1.msra.mxu0 %v33
    %483 = vmatprep.subr.mxu0 0.0
    %484 = vmatpush1.msra.mxu0 %v32
    %485 = vmatprep.subr.mxu0 0.0
    %486 = vmatpush1.msra.mxu0 %v31
    %487 = vmatprep.subr.mxu0 0.0
    %488 = vmatpush1.msra.mxu0 %v30
    %489 = vmatprep.subr.mxu0 0.0
    %490 = vmatpush2.msra.mxu0 0.0
    %491 = vmatprep.subr.mxu0 0.0
    %492 = vmatpush2.msra.mxu0 0.0
    %493 = vmatprep.subr.mxu0 0.0
    %494 = vmatpush2.msra.mxu0 0.0
    %495 = vmatprep.subr.mxu0 0.0
    %496 = vmatpush2.msra.mxu0 0.0
    %497 = vmatprep.subr.mxu0 0.0
    %498 = vmatpush2.msra.mxu0 0.0
    %499 = vmatprep.subr.mxu0 0.0
    %500 = vmatpush2.msra.mxu0 0.0
    %501 = vmatprep.subr.mxu0 0.0
    %502 = vmatpush2.msra.mxu0 0.0
    %503 = vmatprep.subr.mxu0 0.0
    %504 = vmatpush2.msra.mxu0 0.0
    %505 = vmatprep.subr.mxu0 0.0
    %506 = vmatpush2.msra.mxu0 0.0
    %507 = vmatprep.subr.mxu0 0.0
    %508 = vmatpush2.msra.mxu0 0.0
    %509 = vmatprep.subr.mxu0 0.0
    %510 = vmatpush2.msra.mxu0 0.0
    %511 = vmatprep.subr.mxu0 0.0
    %512 = vmatpush2.msra.mxu0 0.0
    %513 = vmatprep.subr.mxu0 0.0
    %514 = vmatpush2.msra.mxu0 0.0
    %515 = vmatprep.subr.mxu0 0.0
    %516 = vmatpush2.msra.mxu0 0.0
    %517 = vmatprep.subr.mxu0 0.0
    %518 = vmatpush2.msra.mxu0 0.0
    %519 = vmatprep.subr.mxu0 0.0
    %520 = vmatpush2.msra.mxu0 0.0
    %521 = vmatprep.mubr.f32.mxu0 0.0
    %522 = vmatmul.mubr.f32.gmra.mxu0 %v453
    %v523 = vpop.f32.mrf.mxu0
    %v524 = vadd.f32 %v176, %v523
    %v525 = vpop.f32.mrf.mxu0
    %526 = vmatprep.mubr.f32.mxu0 0.0
    %527 = vmatmul.mubr.f32.gmra.mxu0 %v455
    %v528 = vpop.f32.mrf.mxu0
    %v529 = vadd.f32 %v176, %v528
    %v530 = vpop.f32.mrf.mxu0
    %531 = vdwg.mxu0
    %v534 = vcombine.high %v524, %v524
    %v536 = vunpack.c.l.s4 1983009808
    %v537 = vunpack.c.0.s8 %v536
    %v538 = vlaneseq
    %v539 = vshrl.u32 %v538, 7
    %v540 = vsub.s32 %v537, %v539
    %v541 = vrot.slane %v524, %v540
    %v543 = vunpack.c.l.s4 1983009808
    %v544 = vunpack.c.0.s8 %v543
    %v545 = vlaneseq
    %v546 = vshrl.u32 %v545, 7
    %v547 = vsub.s32 %v544, %v546
    %v548 = vrot.slane %v534, %v547
    %v549 = vcombine.high %v541, %v541
    %v550 = vcombine.high %v548, %v548
    %v552 = vunpack.c.l.s4 1983009808
    %v553 = vunpack.c.0.s8 %v552
    %v554 = vlaneseq
    %v555 = vshrl.u32 %v554, 7
    %v556 = vsub.s32 %v553, %v555
    %v557 = vrot.slane %v529, %v556
    %v558 = vcombine.high %v557, %v557
    %v559 = vcombine.low %v541, %v549
    %v561 = vunpack.c.l.s4 1983009808
    %v562 = vunpack.c.0.s8 %v561
    %v563 = vlaneseq
    %v564 = vshrl.u32 %v563, 7
    %v565 = vsub.s32 %v562, %v564
    %v566 = vrot.slane %v559, %v565
    %v568 = vunpack.c.l.s4 1983009808
    %v569 = vunpack.c.0.s8 %v568
    %v570 = vlaneseq
    %v571 = vshrl.u32 %v570, 7
    %v572 = vsub.s32 %v569, %v571
    %v573 = vrot.slane %v548, %v572
    %v574 = vcombine.low %v566, %v573
    %v575 = vcombine.low %v550, %v557
    %v577 = vunpack.c.l.s4 1983009808
    %v578 = vunpack.c.0.s8 %v577
    %v579 = vlaneseq
    %v580 = vshrl.u32 %v579, 7
    %v581 = vsub.s32 %v578, %v580
    %v582 = vrot.slane %v575, %v581
    %v584 = vunpack.c.l.s4 1983009808
    %v585 = vunpack.c.0.s8 %v584
    %v586 = vlaneseq
    %v587 = vshrl.u32 %v586, 7
    %v588 = vsub.s32 %v585, %v587
    %v589 = vrot.slane %v558, %v588
    %v590 = vcombine.low %v582, %v589
    %593 = vst.msk [vmem:[#allocation2] sm:$0x3f] %vm107, %v574
    %594 = vst.msk [vmem:[#allocation2 + $0x8] sm:$0x3f] %vm107, %v590
    %595 = vst.msk [vmem:[#allocation2 + $0x6] sm:$0x1] %vm100, 0.0
    %596 = vst.msk [vmem:[#allocation2 + $0xe] sm:$0x1] %vm100, 0.0
    %v597 = vld [vmem:[#allocation2] ss:$2 sm:$0x7]
    %s598 = scalar_lea.vmem [#allocation2], 8
    %v599 = vld [vmem:[%s598] ss:$2 sm:$0x7]
    %s600 = scalar_lea.vmem [#allocation2], 1
    %v601 = vld [vmem:[%s600] ss:$2 sm:$0x7]
    %s602 = scalar_lea.vmem [#allocation2], 9
    %v603 = vld [vmem:[%s602] ss:$2 sm:$0x7]
    %s604 = scalar_lea.vmem [#allocation2], 2
    %v605 = vld [vmem:[%s604] ss:$2 sm:$0x7]
    %s606 = scalar_lea.vmem [#allocation2], 10
    %v607 = vld [vmem:[%s606] ss:$2 sm:$0x7]
    %v608 = vmax.f32 %v601, %v605
    %v609 = vmax.f32 %v603, %v607
    %v610 = vmax.f32 %v597, %v608
    %v611 = vmax.f32 %v599, %v609
    %612 = vst.msk [vmem:[#allocation2] sm:$0x1] %vm100, 0.0
    %613 = vst.msk [vmem:[#allocation2 + $0x8] sm:$0x1] %vm100, 0.0
    %614 = vst.msk [vmem:[#allocation2 + $0x4] sm:$0x1] %vm100, 0.0
    %615 = vst.msk [vmem:[#allocation2 + $0xc] sm:$0x1] %vm100, 0.0
    %v616 = vmax.f32 %v610, 0.0
    %v617 = vmax.f32 %v611, 0.0
    %vm618 = vcmask 124928
    %619 = vst.msk [vmem:[#allocation2 + $0x1] sm:$0x7] %vm618, %v616
    %620 = vst.msk [vmem:[#allocation2 + $0x9] sm:$0x7] %vm618, %v617
    %v621 = vld [vmem:[#allocation2] sm:$0x7]
    %v622 = vld [vmem:[#allocation2 + $0x8] sm:$0x7]
    %v623 = vld [vmem:[#allocation2 + $0x1] sm:$0x7]
    %v624 = vld [vmem:[#allocation2 + $0x9] sm:$0x7]
    %v625 = vld [vmem:[#allocation2 + $0x2] sm:$0x7]
    %v626 = vld [vmem:[#allocation2 + $0xa] sm:$0x7]
    %629 = vrot.lane.b32.xlu0 %v623, 16
    %v630 = vpop.permute.xlu0 %629
    %631 = vrot.lane.b32.xlu0 %v624, 16
    %v632 = vpop.permute.xlu0 %631
    %637 = vrot.lane.b32.xlu0 %v625, 32
    %v638 = vpop.permute.xlu0 %637
    %639 = vrot.lane.b32.xlu0 %v626, 32
    %v640 = vpop.permute.xlu0 %639
    %v643 = vsel %vm132, %v621, %v630
    %v644 = vsel %vm132, %v622, %v632
    %v645 = vsel %vm135, %v643, %v638
    %v646 = vsel %vm135, %v644, %v640
    %v650 = vunpack.c.l.s4 1966171168
    %v651 = vunpack.c.0.s8 %v650
    %v652 = vlaneseq
    %v653 = vshrl.u32 %v652, 7
    %v654 = vsub.s32 %v651, %v653
    %v655 = vrot.slane %v645, %v654
    %v656 = vcombine.high %v655, %v655
    %v658 = vunpack.c.l.s4 1966171168
    %v659 = vunpack.c.0.s8 %v658
    %v660 = vlaneseq
    %v661 = vshrl.u32 %v660, 7
    %v662 = vsub.s32 %v659, %v661
    %v663 = vrot.slane %v655, %v662
    %v665 = vunpack.c.l.s4 1966171168
    %v666 = vunpack.c.0.s8 %v665
    %v667 = vlaneseq
    %v668 = vshrl.u32 %v667, 7
    %v669 = vsub.s32 %v666, %v668
    %v670 = vrot.slane %v656, %v669
    %v671 = vcombine.high %v663, %v663
    %v673 = vunpack.c.l.s4 1966171168
    %v674 = vunpack.c.0.s8 %v673
    %v675 = vlaneseq
    %v676 = vshrl.u32 %v675, 7
    %v677 = vsub.s32 %v674, %v676
    %v678 = vrot.slane %v646, %v677
    %v679 = vcombine.high %v678, %v678
    %v681 = vunpack.c.l.s4 1966171168
    %v682 = vunpack.c.0.s8 %v681
    %v683 = vlaneseq
    %v684 = vshrl.u32 %v683, 7
    %v685 = vsub.s32 %v682, %v684
    %v686 = vrot.slane %v678, %v685
    %v688 = vunpack.c.l.s4 1966171168
    %v689 = vunpack.c.0.s8 %v688
    %v690 = vlaneseq
    %v691 = vshrl.u32 %v690, 7
    %v692 = vsub.s32 %v689, %v691
    %v693 = vrot.slane %v679, %v692
    %v694 = vcombine.high %v686, %v686
    %v695 = vcombine.low %v663, %v670
    %v696 = vcombine.low %v671, %v686
    %v697 = vcombine.low %v693, %v694
    %v699 = vunpack.c.l.s4 1966171168
    %v700 = vunpack.c.0.s8 %v699
    %v701 = vlaneseq
    %v702 = vshrl.u32 %v701, 7
    %v703 = vsub.s32 %v700, %v702
    %v704 = vrot.slane %v695, %v703
    %v706 = vunpack.c.l.s4 1966171168
    %v707 = vunpack.c.0.s8 %v706
    %v708 = vlaneseq
    %v709 = vshrl.u32 %v708, 7
    %v710 = vsub.s32 %v707, %v709
    %v711 = vrot.slane %v696, %v710
    %v713 = vunpack.c.l.s4 1966171168
    %v714 = vunpack.c.0.s8 %v713
    %v715 = vlaneseq
    %v716 = vshrl.u32 %v715, 7
    %v717 = vsub.s32 %v714, %v716
    %v718 = vrot.slane %v697, %v717
    %v719 = vcombine.low %v704, %v711
    %v721 = vunpack.c.l.s4 1966171168
    %v722 = vunpack.c.0.s8 %v721
    %v723 = vlaneseq
    %v724 = vshrl.u32 %v723, 7
    %v725 = vsub.s32 %v722, %v724
    %v726 = vrot.slane %v719, %v725
    %v728 = vunpack.c.l.s4 1966171168
    %v729 = vunpack.c.0.s8 %v728
    %v730 = vlaneseq
    %v731 = vshrl.u32 %v730, 7
    %v732 = vsub.s32 %v729, %v731
    %v733 = vrot.slane %v718, %v732
    %v734 = vcombine.low %v726, %v733
    %v735 = vsel %vm203, %v734, 0
    %737 = vmatprep.subr.mxu0 0.0
    %738 = vmatpush1.msra.mxu0 0.0
    %739 = vmatprep.subr.mxu0 0.0
    %740 = vmatpush1.msra.mxu0 0.0
    %741 = vmatprep.subr.mxu0 0.0
    %742 = vmatpush1.msra.mxu0 0.0
    %743 = vmatprep.subr.mxu0 0.0
    %744 = vmatpush1.msra.mxu0 0.0
    %745 = vmatprep.subr.mxu0 0.0
    %746 = vmatpush1.msra.mxu0 0.0
    %747 = vmatprep.subr.mxu0 0.0
    %748 = vmatpush1.msra.mxu0 0.0
    %749 = vmatprep.subr.mxu0 0.0
    %750 = vmatpush1.msra.mxu0 0.0
    %751 = vmatprep.subr.mxu0 0.0
    %752 = vmatpush1.msra.mxu0 0.0
    %753 = vmatprep.subr.mxu0 0.0
    %754 = vmatpush1.msra.mxu0 0.0
    %755 = vmatprep.subr.mxu0 0.0
    %756 = vmatpush1.msra.mxu0 0.0
    %757 = vmatprep.subr.mxu0 0.0
    %758 = vmatpush1.msra.mxu0 %v35
    %759 = vmatprep.subr.mxu0 0.0
    %760 = vmatpush1.msra.mxu0 %v34
    %761 = vmatprep.subr.mxu0 0.0
    %762 = vmatpush1.msra.mxu0 %v33
    %763 = vmatprep.subr.mxu0 0.0
    %764 = vmatpush1.msra.mxu0 %v32
    %765 = vmatprep.subr.mxu0 0.0
    %766 = vmatpush1.msra.mxu0 %v31
    %767 = vmatprep.subr.mxu0 0.0
    %768 = vmatpush1.msra.mxu0 %v30
    %769 = vmatprep.subr.mxu0 0.0
    %770 = vmatpush2.msra.mxu0 0.0
    %771 = vmatprep.subr.mxu0 0.0
    %772 = vmatpush2.msra.mxu0 0.0
    %773 = vmatprep.subr.mxu0 0.0
    %774 = vmatpush2.msra.mxu0 0.0
    %775 = vmatprep.subr.mxu0 0.0
    %776 = vmatpush2.msra.mxu0 0.0
    %777 = vmatprep.subr.mxu0 0.0
    %778 = vmatpush2.msra.mxu0 0.0
    %779 = vmatprep.subr.mxu0 0.0
    %780 = vmatpush2.msra.mxu0 0.0
    %781 = vmatprep.subr.mxu0 0.0
    %782 = vmatpush2.msra.mxu0 0.0
    %783 = vmatprep.subr.mxu0 0.0
    %784 = vmatpush2.msra.mxu0 0.0
    %785 = vmatprep.subr.mxu0 0.0
    %786 = vmatpush2.msra.mxu0 0.0
    %787 = vmatprep.subr.mxu0 0.0
    %788 = vmatpush2.msra.mxu0 0.0
    %789 = vmatprep.subr.mxu0 0.0
    %790 = vmatpush2.msra.mxu0 0.0
    %791 = vmatprep.subr.mxu0 0.0
    %792 = vmatpush2.msra.mxu0 0.0
    %793 = vmatprep.subr.mxu0 0.0
    %794 = vmatpush2.msra.mxu0 0.0
    %795 = vmatprep.subr.mxu0 0.0
    %796 = vmatpush2.msra.mxu0 0.0
    %797 = vmatprep.subr.mxu0 0.0
    %798 = vmatpush2.msra.mxu0 0.0
    %799 = vmatprep.subr.mxu0 0.0
    %800 = vmatpush2.msra.mxu0 0.0
    %801 = vmatprep.mubr.f32.mxu0 0.0
    %802 = vmatmul.mubr.f32.gmra.mxu0 %v735
    %v803 = vpop.f32.mrf.mxu0
    %v804 = vadd.f32 %v176, %v803
    %v805 = vpop.f32.mrf.mxu0
    %806 = vdwg.mxu0
    %v808 = vcombine.high %v804, %v804
    %v810 = vunpack.c.l.s4 1966171168
    %v811 = vunpack.c.0.s8 %v810
    %v812 = vlaneseq
    %v813 = vshrl.u32 %v812, 7
    %v814 = vsub.s32 %v811, %v813
    %v815 = vrot.slane %v804, %v814
    %v817 = vunpack.c.l.s4 1966171168
    %v818 = vunpack.c.0.s8 %v817
    %v819 = vlaneseq
    %v820 = vshrl.u32 %v819, 7
    %v821 = vsub.s32 %v818, %v820
    %v822 = vrot.slane %v808, %v821
    %v823 = vcombine.high %v815, %v815
    %v824 = vcombine.high %v822, %v822
    %v826 = vunpack.c.l.s4 1966171168
    %v827 = vunpack.c.0.s8 %v826
    %v828 = vlaneseq
    %v829 = vshrl.u32 %v828, 7
    %v830 = vsub.s32 %v827, %v829
    %v831 = vrot.slane %v815, %v830
    %v833 = vunpack.c.l.s4 1966171168
    %v834 = vunpack.c.0.s8 %v833
    %v835 = vlaneseq
    %v836 = vshrl.u32 %v835, 7
    %v837 = vsub.s32 %v834, %v836
    %v838 = vrot.slane %v822, %v837
    %v840 = vunpack.c.l.s4 1966171168
    %v841 = vunpack.c.0.s8 %v840
    %v842 = vlaneseq
    %v843 = vshrl.u32 %v842, 7
    %v844 = vsub.s32 %v841, %v843
    %v845 = vrot.slane %v823, %v844
    %v847 = vunpack.c.l.s4 1966171168
    %v848 = vunpack.c.0.s8 %v847
    %v849 = vlaneseq
    %v850 = vshrl.u32 %v849, 7
    %v851 = vsub.s32 %v848, %v850
    %v852 = vrot.slane %v824, %v851
    %v853 = vcombine.high %v831, %v831
    %v854 = vcombine.high %v845, %v845
    %861 = vst.msk [vmem:[#allocation2] sm:$0x1] %vm100, 0.0
    %862 = vst.msk [vmem:[#allocation2 + $0x8] sm:$0x1] %vm100, 0.0
    %863 = vst.msk [vmem:[#allocation2 + $0x4] sm:$0x1] %vm100, 0.0
    %864 = vst.msk [vmem:[#allocation2 + $0xc] sm:$0x1] %vm100, 0.0
    %v865 = vmax.f32 %v831, 0.0
    %v866 = vmax.f32 %v845, 0.0
    %v867 = vmax.f32 %v853, 0.0
    %v868 = vmax.f32 %v854, 0.0
    %v869 = vmax.f32 %v838, 0.0
    %v870 = vmax.f32 %v852, 0.0
    %v877 = vcombine.low %v865, %v866
    %v879 = vunpack.c.l.s4 1966171168
    %v880 = vunpack.c.0.s8 %v879
    %v881 = vlaneseq
    %v882 = vshrl.u32 %v881, 7
    %v883 = vsub.s32 %v880, %v882
    %v884 = vrot.slane %v877, %v883
    %v886 = vunpack.c.l.s4 1966171168
    %v887 = vunpack.c.0.s8 %v886
    %v888 = vlaneseq
    %v889 = vshrl.u32 %v888, 7
    %v890 = vsub.s32 %v887, %v889
    %v891 = vrot.slane %v867, %v890
    %v892 = vcombine.low %v884, %v891
    %v894 = vunpack.c.l.s4 1966171168
    %v895 = vunpack.c.0.s8 %v894
    %v896 = vlaneseq
    %v897 = vshrl.u32 %v896, 7
    %v898 = vsub.s32 %v895, %v897
    %v899 = vrot.slane %v892, %v898
    %v900 = vcombine.low %v868, %v869
    %v902 = vunpack.c.l.s4 1966171168
    %v903 = vunpack.c.0.s8 %v902
    %v904 = vlaneseq
    %v905 = vshrl.u32 %v904, 7
    %v906 = vsub.s32 %v903, %v905
    %v907 = vrot.slane %v900, %v906
    %v909 = vunpack.c.l.s4 1966171168
    %v910 = vunpack.c.0.s8 %v909
    %v911 = vlaneseq
    %v912 = vshrl.u32 %v911, 7
    %v913 = vsub.s32 %v910, %v912
    %v914 = vrot.slane %v870, %v913
    %v915 = vcombine.low %v907, %v914
    %v917 = vunpack.c.l.s4 1966171168
    %v918 = vunpack.c.0.s8 %v917
    %v919 = vlaneseq
    %v920 = vshrl.u32 %v919, 7
    %v921 = vsub.s32 %v918, %v920
    %v922 = vrot.slane %v915, %v921
    %925 = vst.msk [vmem:[#allocation2 + $0x1] sm:$0x7] %vm618, %v899
    %926 = vst.msk [vmem:[#allocation2 + $0x9] sm:$0x7] %vm618, %v922
    %v927 = vld [vmem:[#allocation2] sm:$0x7]
    %v928 = vld [vmem:[#allocation2 + $0x8] sm:$0x7]
    %v929 = vld [vmem:[#allocation2 + $0x1] sm:$0x7]
    %v930 = vld [vmem:[#allocation2 + $0x9] sm:$0x7]
    %v931 = vld [vmem:[#allocation2 + $0x2] sm:$0x7]
    %v932 = vld [vmem:[#allocation2 + $0xa] sm:$0x7]
    %935 = vrot.lane.b32.xlu0 %v929, 16
    %v936 = vpop.permute.xlu0 %935
    %937 = vrot.lane.b32.xlu0 %v930, 16
    %v938 = vpop.permute.xlu0 %937
    %943 = vrot.lane.b32.xlu0 %v931, 32
    %v944 = vpop.permute.xlu0 %943
    %945 = vrot.lane.b32.xlu0 %v932, 32
    %v946 = vpop.permute.xlu0 %945
    %v949 = vsel %vm132, %v927, %v936
    %v950 = vsel %vm132, %v928, %v938
    %v951 = vsel %vm135, %v949, %v944
    %v952 = vsel %vm135, %v950, %v946
    %v956 = vunpack.c.l.s4 1966171168
    %v957 = vunpack.c.0.s8 %v956
    %v958 = vlaneseq
    %v959 = vshrl.u32 %v958, 7
    %v960 = vsub.s32 %v957, %v959
    %v961 = vrot.slane %v951, %v960
    %v962 = vcombine.high %v961, %v961
    %v964 = vunpack.c.l.s4 1966171168
    %v965 = vunpack.c.0.s8 %v964
    %v966 = vlaneseq
    %v967 = vshrl.u32 %v966, 7
    %v968 = vsub.s32 %v965, %v967
    %v969 = vrot.slane %v961, %v968
    %v971 = vunpack.c.l.s4 1966171168
    %v972 = vunpack.c.0.s8 %v971
    %v973 = vlaneseq
    %v974 = vshrl.u32 %v973, 7
    %v975 = vsub.s32 %v972, %v974
    %v976 = vrot.slane %v962, %v975
    %v977 = vcombine.high %v969, %v969
    %v979 = vunpack.c.l.s4 1966171168
    %v980 = vunpack.c.0.s8 %v979
    %v981 = vlaneseq
    %v982 = vshrl.u32 %v981, 7
    %v983 = vsub.s32 %v980, %v982
    %v984 = vrot.slane %v952, %v983
    %v985 = vcombine.high %v984, %v984
    %v987 = vunpack.c.l.s4 1966171168
    %v988 = vunpack.c.0.s8 %v987
    %v989 = vlaneseq
    %v990 = vshrl.u32 %v989, 7
    %v991 = vsub.s32 %v988, %v990
    %v992 = vrot.slane %v984, %v991
    %v994 = vunpack.c.l.s4 1966171168
    %v995 = vunpack.c.0.s8 %v994
    %v996 = vlaneseq
    %v997 = vshrl.u32 %v996, 7
    %v998 = vsub.s32 %v995, %v997
    %v999 = vrot.slane %v985, %v998
    %v1000 = vcombine.high %v992, %v992
    %v1001 = vcombine.low %v969, %v976
    %v1002 = vcombine.low %v977, %v992
    %v1003 = vcombine.low %v999, %v1000
    %v1005 = vunpack.c.l.s4 1966171168
    %v1006 = vunpack.c.0.s8 %v1005
    %v1007 = vlaneseq
    %v1008 = vshrl.u32 %v1007, 7
    %v1009 = vsub.s32 %v1006, %v1008
    %v1010 = vrot.slane %v1001, %v1009
    %v1012 = vunpack.c.l.s4 1966171168
    %v1013 = vunpack.c.0.s8 %v1012
    %v1014 = vlaneseq
    %v1015 = vshrl.u32 %v1014, 7
    %v1016 = vsub.s32 %v1013, %v1015
    %v1017 = vrot.slane %v1002, %v1016
    %v1019 = vunpack.c.l.s4 1966171168
    %v1020 = vunpack.c.0.s8 %v1019
    %v1021 = vlaneseq
    %v1022 = vshrl.u32 %v1021, 7
    %v1023 = vsub.s32 %v1020, %v1022
    %v1024 = vrot.slane %v1003, %v1023
    %v1025 = vcombine.low %v1010, %v1017
    %v1027 = vunpack.c.l.s4 1966171168
    %v1028 = vunpack.c.0.s8 %v1027
    %v1029 = vlaneseq
    %v1030 = vshrl.u32 %v1029, 7
    %v1031 = vsub.s32 %v1028, %v1030
    %v1032 = vrot.slane %v1025, %v1031
    %v1034 = vunpack.c.l.s4 1966171168
    %v1035 = vunpack.c.0.s8 %v1034
    %v1036 = vlaneseq
    %v1037 = vshrl.u32 %v1036, 7
    %v1038 = vsub.s32 %v1035, %v1037
    %v1039 = vrot.slane %v1024, %v1038
    %v1040 = vcombine.low %v1032, %v1039
    %v1041 = vsel %vm203, %v1040, 0
    %1043 = vmatprep.subr.mxu0 0.0
    %1044 = vmatpush1.msra.mxu0 0.0
    %1045 = vmatprep.subr.mxu0 0.0
    %1046 = vmatpush1.msra.mxu0 0.0
    %1047 = vmatprep.subr.mxu0 0.0
    %1048 = vmatpush1.msra.mxu0 0.0
    %1049 = vmatprep.subr.mxu0 0.0
    %1050 = vmatpush1.msra.mxu0 0.0
    %1051 = vmatprep.subr.mxu0 0.0
    %1052 = vmatpush1.msra.mxu0 0.0
    %1053 = vmatprep.subr.mxu0 0.0
    %1054 = vmatpush1.msra.mxu0 0.0
    %1055 = vmatprep.subr.mxu0 0.0
    %1056 = vmatpush1.msra.mxu0 0.0
    %1057 = vmatprep.subr.mxu0 0.0
    %1058 = vmatpush1.msra.mxu0 0.0
    %1059 = vmatprep.subr.mxu0 0.0
    %1060 = vmatpush1.msra.mxu0 0.0
    %1061 = vmatprep.subr.mxu0 0.0
    %1062 = vmatpush1.msra.mxu0 0.0
    %1063 = vmatprep.subr.mxu0 0.0
    %1064 = vmatpush1.msra.mxu0 %v35
    %1065 = vmatprep.subr.mxu0 0.0
    %1066 = vmatpush1.msra.mxu0 %v34
    %1067 = vmatprep.subr.mxu0 0.0
    %1068 = vmatpush1.msra.mxu0 %v33
    %1069 = vmatprep.subr.mxu0 0.0
    %1070 = vmatpush1.msra.mxu0 %v32
    %1071 = vmatprep.subr.mxu0 0.0
    %1072 = vmatpush1.msra.mxu0 %v31
    %1073 = vmatprep.subr.mxu0 0.0
    %1074 = vmatpush1.msra.mxu0 %v30
    %1075 = vmatprep.subr.mxu0 0.0
    %1076 = vmatpush2.msra.mxu0 0.0
    %1077 = vmatprep.subr.mxu0 0.0
    %1078 = vmatpush2.msra.mxu0 0.0
    %1079 = vmatprep.subr.mxu0 0.0
    %1080 = vmatpush2.msra.mxu0 0.0
    %1081 = vmatprep.subr.mxu0 0.0
    %1082 = vmatpush2.msra.mxu0 0.0
    %1083 = vmatprep.subr.mxu0 0.0
    %1084 = vmatpush2.msra.mxu0 0.0
    %1085 = vmatprep.subr.mxu0 0.0
    %1086 = vmatpush2.msra.mxu0 0.0
    %1087 = vmatprep.subr.mxu0 0.0
    %1088 = vmatpush2.msra.mxu0 0.0
    %1089 = vmatprep.subr.mxu0 0.0
    %1090 = vmatpush2.msra.mxu0 0.0
    %1091 = vmatprep.subr.mxu0 0.0
    %1092 = vmatpush2.msra.mxu0 0.0
    %1093 = vmatprep.subr.mxu0 0.0
    %1094 = vmatpush2.msra.mxu0 0.0
    %1095 = vmatprep.subr.mxu0 0.0
    %1096 = vmatpush2.msra.mxu0 0.0
    %1097 = vmatprep.subr.mxu0 0.0
    %1098 = vmatpush2.msra.mxu0 0.0
    %1099 = vmatprep.subr.mxu0 0.0
    %1100 = vmatpush2.msra.mxu0 0.0
    %1101 = vmatprep.subr.mxu0 0.0
    %1102 = vmatpush2.msra.mxu0 0.0
    %1103 = vmatprep.subr.mxu0 0.0
    %1104 = vmatpush2.msra.mxu0 0.0
    %1105 = vmatprep.subr.mxu0 0.0
    %1106 = vmatpush2.msra.mxu0 0.0
    %1107 = vmatprep.mubr.f32.mxu0 0.0
    %1108 = vmatmul.mubr.f32.gmra.mxu0 %v1041
    %v1109 = vpop.f32.mrf.mxu0
    %v1110 = vadd.f32 %v176, %v1109
    %v1111 = vpop.f32.mrf.mxu0
    %1112 = vdwg.mxu0
    %v1114 = vcombine.high %v1110, %v1110
    %v1116 = vunpack.c.l.s4 1966171168
    %v1117 = vunpack.c.0.s8 %v1116
    %v1118 = vlaneseq
    %v1119 = vshrl.u32 %v1118, 7
    %v1120 = vsub.s32 %v1117, %v1119
    %v1121 = vrot.slane %v1110, %v1120
    %v1123 = vunpack.c.l.s4 1966171168
    %v1124 = vunpack.c.0.s8 %v1123
    %v1125 = vlaneseq
    %v1126 = vshrl.u32 %v1125, 7
    %v1127 = vsub.s32 %v1124, %v1126
    %v1128 = vrot.slane %v1114, %v1127
    %v1129 = vcombine.high %v1121, %v1121
    %v1130 = vcombine.high %v1128, %v1128
    %v1132 = vunpack.c.l.s4 1966171168
    %v1133 = vunpack.c.0.s8 %v1132
    %v1134 = vlaneseq
    %v1135 = vshrl.u32 %v1134, 7
    %v1136 = vsub.s32 %v1133, %v1135
    %v1137 = vrot.slane %v1121, %v1136
    %v1139 = vunpack.c.l.s4 1966171168
    %v1140 = vunpack.c.0.s8 %v1139
    %v1141 = vlaneseq
    %v1142 = vshrl.u32 %v1141, 7
    %v1143 = vsub.s32 %v1140, %v1142
    %v1144 = vrot.slane %v1128, %v1143
    %v1146 = vunpack.c.l.s4 1966171168
    %v1147 = vunpack.c.0.s8 %v1146
    %v1148 = vlaneseq
    %v1149 = vshrl.u32 %v1148, 7
    %v1150 = vsub.s32 %v1147, %v1149
    %v1151 = vrot.slane %v1129, %v1150
    %v1153 = vunpack.c.l.s4 1966171168
    %v1154 = vunpack.c.0.s8 %v1153
    %v1155 = vlaneseq
    %v1156 = vshrl.u32 %v1155, 7
    %v1157 = vsub.s32 %v1154, %v1156
    %v1158 = vrot.slane %v1130, %v1157
    %v1159 = vcombine.high %v1137, %v1137
    %v1160 = vcombine.high %v1151, %v1151
    %v1170 = vunpack.c.l.s4 1966171168
    %v1171 = vunpack.c.0.s8 %v1170
    %v1172 = vlaneseq
    %v1173 = vshrl.u32 %v1172, 7
    %v1174 = vsub.s32 %v1171, %v1173
    %v1175 = vrot.slane %v610, %v1174
    %v1176 = vcombine.high %v1175, %v1175
    %v1178 = vunpack.c.l.s4 1966171168
    %v1179 = vunpack.c.0.s8 %v1178
    %v1180 = vlaneseq
    %v1181 = vshrl.u32 %v1180, 7
    %v1182 = vsub.s32 %v1179, %v1181
    %v1183 = vrot.slane %v1175, %v1182
    %v1185 = vunpack.c.l.s4 1966171168
    %v1186 = vunpack.c.0.s8 %v1185
    %v1187 = vlaneseq
    %v1188 = vshrl.u32 %v1187, 7
    %v1189 = vsub.s32 %v1186, %v1188
    %v1190 = vrot.slane %v1176, %v1189
    %v1191 = vcombine.high %v1183, %v1183
    %v1193 = vunpack.c.l.s4 1966171168
    %v1194 = vunpack.c.0.s8 %v1193
    %v1195 = vlaneseq
    %v1196 = vshrl.u32 %v1195, 7
    %v1197 = vsub.s32 %v1194, %v1196
    %v1198 = vrot.slane %v611, %v1197
    %v1199 = vcombine.high %v1198, %v1198
    %v1201 = vunpack.c.l.s4 1966171168
    %v1202 = vunpack.c.0.s8 %v1201
    %v1203 = vlaneseq
    %v1204 = vshrl.u32 %v1203, 7
    %v1205 = vsub.s32 %v1202, %v1204
    %v1206 = vrot.slane %v1198, %v1205
    %v1208 = vunpack.c.l.s4 1966171168
    %v1209 = vunpack.c.0.s8 %v1208
    %v1210 = vlaneseq
    %v1211 = vshrl.u32 %v1210, 7
    %v1212 = vsub.s32 %v1209, %v1211
    %v1213 = vrot.slane %v1199, %v1212
    %v1214 = vcombine.high %v1206, %v1206
    %v1221 = vadd.f32 %v1137, %v1183
    %v1222 = vadd.f32 %v1151, %v1190
    %v1223 = vadd.f32 %v1159, %v1191
    %v1224 = vadd.f32 %v1160, %v1206
    %v1225 = vadd.f32 %v1144, %v1213
    %v1226 = vadd.f32 %v1158, %v1214
    %v1233 = vcombine.low %v1221, %v1222
    %v1235 = vunpack.c.l.s4 1966171168
    %v1236 = vunpack.c.0.s8 %v1235
    %v1237 = vlaneseq
    %v1238 = vshrl.u32 %v1237, 7
    %v1239 = vsub.s32 %v1236, %v1238
    %v1240 = vrot.slane %v1233, %v1239
    %v1242 = vunpack.c.l.s4 1966171168
    %v1243 = vunpack.c.0.s8 %v1242
    %v1244 = vlaneseq
    %v1245 = vshrl.u32 %v1244, 7
    %v1246 = vsub.s32 %v1243, %v1245
    %v1247 = vrot.slane %v1223, %v1246
    %v1248 = vcombine.low %v1240, %v1247
    %v1250 = vunpack.c.l.s4 1966171168
    %v1251 = vunpack.c.0.s8 %v1250
    %v1252 = vlaneseq
    %v1253 = vshrl.u32 %v1252, 7
    %v1254 = vsub.s32 %v1251, %v1253
    %v1255 = vrot.slane %v1248, %v1254
    %v1256 = vcombine.low %v1224, %v1225
    %v1258 = vunpack.c.l.s4 1966171168
    %v1259 = vunpack.c.0.s8 %v1258
    %v1260 = vlaneseq
    %v1261 = vshrl.u32 %v1260, 7
    %v1262 = vsub.s32 %v1259, %v1261
    %v1263 = vrot.slane %v1256, %v1262
    %v1265 = vunpack.c.l.s4 1966171168
    %v1266 = vunpack.c.0.s8 %v1265
    %v1267 = vlaneseq
    %v1268 = vshrl.u32 %v1267, 7
    %v1269 = vsub.s32 %v1266, %v1268
    %v1270 = vrot.slane %v1226, %v1269
    %v1271 = vcombine.low %v1263, %v1270
    %v1273 = vunpack.c.l.s4 1966171168
    %v1274 = vunpack.c.0.s8 %v1273
    %v1275 = vlaneseq
    %v1276 = vshrl.u32 %v1275, 7
    %v1277 = vsub.s32 %v1274, %v1276
    %v1278 = vrot.slane %v1271, %v1277
    %1281 = vst.msk [vmem:[#allocation2] sm:$0x7] %vm618, %v1255
    %1282 = vst.msk [vmem:[#allocation2 + $0x8] sm:$0x7] %vm618, %v1278
    %1283 = vst.msk [vmem:[#allocation2 + $0x3] sm:$0x1] %vm100, 0.0
    %1284 = vst.msk [vmem:[#allocation2 + $0xb] sm:$0x1] %vm100, 0.0
    %v1285 = vld [vmem:[#allocation2] ss:$2 sm:$0x1]
    %v1286 = vld [vmem:[%s598] ss:$2 sm:$0x1]
    %v1287 = vld [vmem:[%s600] ss:$2 sm:$0x1]
    %v1288 = vld [vmem:[%s602] ss:$2 sm:$0x1]
    %v1289 = vld [vmem:[%s604] ss:$2 sm:$0x1]
    %v1290 = vld [vmem:[%s606] ss:$2 sm:$0x1]
    %v1291 = vmax.f32 %v1287, %v1289
    %v1292 = vmax.f32 %v1288, %v1290
    %v1293 = vmax.f32 %v1285, %v1291
    %v1294 = vmax.f32 %v1286, %v1292
    %1295 = vst.msk [vmem:[#allocation2] sm:$0x1] %vm100, 0.0
    %1296 = vst.msk [vmem:[#allocation2 + $0x8] sm:$0x1] %vm100, 0.0
    %1297 = vst.msk [vmem:[#allocation2 + $0x2] sm:$0x1] %vm100, 0.0
    %1298 = vst.msk [vmem:[#allocation2 + $0xa] sm:$0x1] %vm100, 0.0
    %v1299 = vmax.f32 %v1293, 0.0
    %v1300 = vmax.f32 %v1294, 0.0
    %1301 = vst.msk [vmem:[#allocation2 + $0x1] sm:$0x1] %vm100, %v1299
    %1302 = vst.msk [vmem:[#allocation2 + $0x9] sm:$0x1] %vm100, %v1300
    %v1303 = vld [vmem:[#allocation2] sm:$0x1]
    %v1304 = vld [vmem:[#allocation2 + $0x8] sm:$0x1]
    %v1305 = vld [vmem:[#allocation2 + $0x1] sm:$0x1]
    %v1306 = vld [vmem:[#allocation2 + $0x9] sm:$0x1]
    %v1307 = vld [vmem:[#allocation2 + $0x2] sm:$0x1]
    %v1308 = vld [vmem:[#allocation2 + $0xa] sm:$0x1]
    %1311 = vrot.lane.b32.xlu0 %v1305, 16
    %v1312 = vpop.permute.xlu0 %1311
    %1313 = vrot.lane.b32.xlu0 %v1306, 16
    %v1314 = vpop.permute.xlu0 %1313
    %1319 = vrot.lane.b32.xlu0 %v1307, 32
    %v1320 = vpop.permute.xlu0 %1319
    %1321 = vrot.lane.b32.xlu0 %v1308, 32
    %v1322 = vpop.permute.xlu0 %1321
    %v1325 = vsel %vm132, %v1303, %v1312
    %v1326 = vsel %vm132, %v1304, %v1314
    %v1327 = vsel %vm135, %v1325, %v1320
    %v1328 = vsel %vm135, %v1326, %v1322
    %v1331 = vrot.slane %v1328, 7
    %vm1332 = vcmask 1041409
    %v1333 = vsel %vm1332, %v1331, %v1327
    %v1334 = vsel %vm203, %v1333, 0
    %1336 = vmatprep.subr.mxu0 0.0
    %1337 = vmatpush1.msra.mxu0 0.0
    %1338 = vmatprep.subr.mxu0 0.0
    %1339 = vmatpush1.msra.mxu0 0.0
    %1340 = vmatprep.subr.mxu0 0.0
    %1341 = vmatpush1.msra.mxu0 0.0
    %1342 = vmatprep.subr.mxu0 0.0
    %1343 = vmatpush1.msra.mxu0 0.0
    %1344 = vmatprep.subr.mxu0 0.0
    %1345 = vmatpush1.msra.mxu0 0.0
    %1346 = vmatprep.subr.mxu0 0.0
    %1347 = vmatpush1.msra.mxu0 0.0
    %1348 = vmatprep.subr.mxu0 0.0
    %1349 = vmatpush1.msra.mxu0 0.0
    %1350 = vmatprep.subr.mxu0 0.0
    %1351 = vmatpush1.msra.mxu0 0.0
    %1352 = vmatprep.subr.mxu0 0.0
    %1353 = vmatpush1.msra.mxu0 0.0
    %1354 = vmatprep.subr.mxu0 0.0
    %1355 = vmatpush1.msra.mxu0 0.0
    %1356 = vmatprep.subr.mxu0 0.0
    %1357 = vmatpush1.msra.mxu0 %v35
    %1358 = vmatprep.subr.mxu0 0.0
    %1359 = vmatpush1.msra.mxu0 %v34
    %1360 = vmatprep.subr.mxu0 0.0
    %1361 = vmatpush1.msra.mxu0 %v33
    %1362 = vmatprep.subr.mxu0 0.0
    %1363 = vmatpush1.msra.mxu0 %v32
    %1364 = vmatprep.subr.mxu0 0.0
    %1365 = vmatpush1.msra.mxu0 %v31
    %1366 = vmatprep.subr.mxu0 0.0
    %1367 = vmatpush1.msra.mxu0 %v30
    %1368 = vmatprep.subr.mxu0 0.0
    %1369 = vmatpush2.msra.mxu0 0.0
    %1370 = vmatprep.subr.mxu0 0.0
    %1371 = vmatpush2.msra.mxu0 0.0
    %1372 = vmatprep.subr.mxu0 0.0
    %1373 = vmatpush2.msra.mxu0 0.0
    %1374 = vmatprep.subr.mxu0 0.0
    %1375 = vmatpush2.msra.mxu0 0.0
    %1376 = vmatprep.subr.mxu0 0.0
    %1377 = vmatpush2.msra.mxu0 0.0
    %1378 = vmatprep.subr.mxu0 0.0
    %1379 = vmatpush2.msra.mxu0 0.0
    %1380 = vmatprep.subr.mxu0 0.0
    %1381 = vmatpush2.msra.mxu0 0.0
    %1382 = vmatprep.subr.mxu0 0.0
    %1383 = vmatpush2.msra.mxu0 0.0
    %1384 = vmatprep.subr.mxu0 0.0
    %1385 = vmatpush2.msra.mxu0 0.0
    %1386 = vmatprep.subr.mxu0 0.0
    %1387 = vmatpush2.msra.mxu0 0.0
    %1388 = vmatprep.subr.mxu0 0.0
    %1389 = vmatpush2.msra.mxu0 0.0
    %1390 = vmatprep.subr.mxu0 0.0
    %1391 = vmatpush2.msra.mxu0 0.0
    %1392 = vmatprep.subr.mxu0 0.0
    %1393 = vmatpush2.msra.mxu0 0.0
    %1394 = vmatprep.subr.mxu0 0.0
    %1395 = vmatpush2.msra.mxu0 0.0
    %1396 = vmatprep.subr.mxu0 0.0
    %1397 = vmatpush2.msra.mxu0 0.0
    %1398 = vmatprep.subr.mxu0 0.0
    %1399 = vmatpush2.msra.mxu0 0.0
    %1400 = vmatprep.mubr.f32.mxu0 0.0
    %1401 = vmatmul.mubr.f32.gmra.mxu0 %v1334
    %v1402 = vpop.f32.mrf.mxu0
    %v1403 = vadd.f32 %v176, %v1402
    %v1404 = vpop.f32.mrf.mxu0
    %1405 = vdwg.mxu0
    %v1408 = vunpack.c.l.s4 1966171168
    %v1409 = vunpack.c.0.s8 %v1408
    %v1410 = vlaneseq
    %v1411 = vshrl.u32 %v1410, 7
    %v1412 = vsub.s32 %v1409, %v1411
    %v1413 = vrot.slane %v1403, %v1412
    %v1414 = vcombine.high %v1413, %v1413
    %v1416 = vunpack.c.l.s4 1966171168
    %v1417 = vunpack.c.0.s8 %v1416
    %v1418 = vlaneseq
    %v1419 = vshrl.u32 %v1418, 7
    %v1420 = vsub.s32 %v1417, %v1419
    %v1421 = vrot.slane %v1413, %v1420
    %v1423 = vunpack.c.l.s4 1966171168
    %v1424 = vunpack.c.0.s8 %v1423
    %v1425 = vlaneseq
    %v1426 = vshrl.u32 %v1425, 7
    %v1427 = vsub.s32 %v1424, %v1426
    %v1428 = vrot.slane %v1414, %v1427
    %1431 = vst.msk [vmem:[#allocation2] sm:$0x1] %vm100, 0.0
    %1432 = vst.msk [vmem:[#allocation2 + $0x8] sm:$0x1] %vm100, 0.0
    %1433 = vst.msk [vmem:[#allocation2 + $0x2] sm:$0x1] %vm100, 0.0
    %1434 = vst.msk [vmem:[#allocation2 + $0xa] sm:$0x1] %vm100, 0.0
    %v1435 = vmax.f32 %v1421, 0.0
    %v1436 = vmax.f32 %v1428, 0.0
    %1437 = vst.msk [vmem:[#allocation2 + $0x1] sm:$0x1] %vm100, %v1435
    %1438 = vst.msk [vmem:[#allocation2 + $0x9] sm:$0x1] %vm100, %v1436
    %v1439 = vld [vmem:[#allocation2] sm:$0x1]
    %v1440 = vld [vmem:[#allocation2 + $0x8] sm:$0x1]
    %v1441 = vld [vmem:[#allocation2 + $0x1] sm:$0x1]
    %v1442 = vld [vmem:[#allocation2 + $0x9] sm:$0x1]
    %v1443 = vld [vmem:[#allocation2 + $0x2] sm:$0x1]
    %v1444 = vld [vmem:[#allocation2 + $0xa] sm:$0x1]
    %1447 = vrot.lane.b32.xlu0 %v1441, 16
    %v1448 = vpop.permute.xlu0 %1447
    %1449 = vrot.lane.b32.xlu0 %v1442, 16
    %v1450 = vpop.permute.xlu0 %1449
    %1455 = vrot.lane.b32.xlu0 %v1443, 32
    %v1456 = vpop.permute.xlu0 %1455
    %1457 = vrot.lane.b32.xlu0 %v1444, 32
    %v1458 = vpop.permute.xlu0 %1457
    %v1461 = vsel %vm132, %v1439, %v1448
    %v1462 = vsel %vm132, %v1440, %v1450
    %v1463 = vsel %vm135, %v1461, %v1456
    %v1464 = vsel %vm135, %v1462, %v1458
    %v1467 = vrot.slane %v1464, 7
    %v1468 = vsel %vm1332, %v1467, %v1463
    %v1469 = vsel %vm203, %v1468, 0
    %1471 = vmatprep.subr.mxu0 0.0
    %1472 = vmatpush1.msra.mxu0 0.0
    %1473 = vmatprep.subr.mxu0 0.0
    %1474 = vmatpush1.msra.mxu0 0.0
    %1475 = vmatprep.subr.mxu0 0.0
    %1476 = vmatpush1.msra.mxu0 0.0
    %1477 = vmatprep.subr.mxu0 0.0
    %1478 = vmatpush1.msra.mxu0 0.0
    %1479 = vmatprep.subr.mxu0 0.0
    %1480 = vmatpush1.msra.mxu0 0.0
    %1481 = vmatprep.subr.mxu0 0.0
    %1482 = vmatpush1.msra.mxu0 0.0
    %1483 = vmatprep.subr.mxu0 0.0
    %1484 = vmatpush1.msra.mxu0 0.0
    %1485 = vmatprep.subr.mxu0 0.0
    %1486 = vmatpush1.msra.mxu0 0.0
    %1487 = vmatprep.subr.mxu0 0.0
    %1488 = vmatpush1.msra.mxu0 0.0
    %1489 = vmatprep.subr.mxu0 0.0
    %1490 = vmatpush1.msra.mxu0 0.0
    %1491 = vmatprep.subr.mxu0 0.0
    %1492 = vmatpush1.msra.mxu0 %v35
    %1493 = vmatprep.subr.mxu0 0.0
    %1494 = vmatpush1.msra.mxu0 %v34
    %1495 = vmatprep.subr.mxu0 0.0
    %1496 = vmatpush1.msra.mxu0 %v33
    %1497 = vmatprep.subr.mxu0 0.0
    %1498 = vmatpush1.msra.mxu0 %v32
    %1499 = vmatprep.subr.mxu0 0.0
    %1500 = vmatpush1.msra.mxu0 %v31
    %1501 = vmatprep.subr.mxu0 0.0
    %1502 = vmatpush1.msra.mxu0 %v30
    %1503 = vmatprep.subr.mxu0 0.0
    %1504 = vmatpush2.msra.mxu0 0.0
    %1505 = vmatprep.subr.mxu0 0.0
    %1506 = vmatpush2.msra.mxu0 0.0
    %1507 = vmatprep.subr.mxu0 0.0
    %1508 = vmatpush2.msra.mxu0 0.0
    %1509 = vmatprep.subr.mxu0 0.0
    %1510 = vmatpush2.msra.mxu0 0.0
    %1511 = vmatprep.subr.mxu0 0.0
    %1512 = vmatpush2.msra.mxu0 0.0
    %1513 = vmatprep.subr.mxu0 0.0
    %1514 = vmatpush2.msra.mxu0 0.0
    %1515 = vmatprep.subr.mxu0 0.0
    %1516 = vmatpush2.msra.mxu0 0.0
    %1517 = vmatprep.subr.mxu0 0.0
    %1518 = vmatpush2.msra.mxu0 0.0
    %1519 = vmatprep.subr.mxu0 0.0
    %1520 = vmatpush2.msra.mxu0 0.0
    %1521 = vmatprep.subr.mxu0 0.0
    %1522 = vmatpush2.msra.mxu0 0.0
    %1523 = vmatprep.subr.mxu0 0.0
    %1524 = vmatpush2.msra.mxu0 0.0
    %1525 = vmatprep.subr.mxu0 0.0
    %1526 = vmatpush2.msra.mxu0 0.0
    %1527 = vmatprep.subr.mxu0 0.0
    %1528 = vmatpush2.msra.mxu0 0.0
    %1529 = vmatprep.subr.mxu0 0.0
    %1530 = vmatpush2.msra.mxu0 0.0
    %1531 = vmatprep.subr.mxu0 0.0
    %1532 = vmatpush2.msra.mxu0 0.0
    %1533 = vmatprep.subr.mxu0 0.0
    %1534 = vmatpush2.msra.mxu0 0.0
    %1535 = vmatprep.mubr.f32.mxu0 0.0
    %1536 = vmatmul.mubr.f32.gmra.mxu0 %v1469
    %v1537 = vpop.f32.mrf.mxu0
    %v1538 = vadd.f32 %v176, %v1537
    %v1539 = vpop.f32.mrf.mxu0
    %1540 = vdwg.mxu0
    %v1543 = vunpack.c.l.s4 1966171168
    %v1544 = vunpack.c.0.s8 %v1543
    %v1545 = vlaneseq
    %v1546 = vshrl.u32 %v1545, 7
    %v1547 = vsub.s32 %v1544, %v1546
    %v1548 = vrot.slane %v1538, %v1547
    %v1549 = vcombine.high %v1548, %v1548
    %v1551 = vunpack.c.l.s4 1966171168
    %v1552 = vunpack.c.0.s8 %v1551
    %v1553 = vlaneseq
    %v1554 = vshrl.u32 %v1553, 7
    %v1555 = vsub.s32 %v1552, %v1554
    %v1556 = vrot.slane %v1548, %v1555
    %v1558 = vunpack.c.l.s4 1966171168
    %v1559 = vunpack.c.0.s8 %v1558
    %v1560 = vlaneseq
    %v1561 = vshrl.u32 %v1560, 7
    %v1562 = vsub.s32 %v1559, %v1561
    %v1563 = vrot.slane %v1549, %v1562
    %v1566 = vadd.f32 %v1556, %v1293
    %v1567 = vadd.f32 %v1563, %v1294
    %v1569 = vlaneseq
    %v1570 = vshrl.u32 %v1569, 7
    %v1571 = vsub.s32 0, %v1570
    %v1572 = vrot.slane %v39, %v1571
    %v1576 = vcombine.low %v1566, %v1567
    %v1578 = vunpack.c.l.s4 1966171168
    %v1579 = vunpack.c.0.s8 %v1578
    %v1580 = vlaneseq
    %v1581 = vshrl.u32 %v1580, 7
    %v1582 = vsub.s32 %v1579, %v1581
    %v1583 = vrot.slane %v1576, %v1582
    %v1585 = vunpack.c.l.s4 1966171168
    %v1586 = vunpack.c.0.s8 %v1585
    %v1587 = vlaneseq
    %v1588 = vshrl.u32 %v1587, 7
    %v1589 = vsub.s32 %v1586, %v1588
    %v1590 = vrot.slane %v1583, %v1589
    %v1591 = vsel %vm132, %v1590, 0
    %1593 = vmatprep.subr.mxu0 0.0
    %1594 = vmatpush1.msra.mxu0 0.0
    %1595 = vmatprep.subr.mxu0 0.0
    %1596 = vmatpush1.msra.mxu0 0.0
    %1597 = vmatprep.subr.mxu0 0.0
    %1598 = vmatpush1.msra.mxu0 0.0
    %1599 = vmatprep.subr.mxu0 0.0
    %1600 = vmatpush1.msra.mxu0 0.0
    %1601 = vmatprep.subr.mxu0 0.0
    %1602 = vmatpush1.msra.mxu0 0.0
    %1603 = vmatprep.subr.mxu0 0.0
    %1604 = vmatpush1.msra.mxu0 0.0
    %1605 = vmatprep.subr.mxu0 0.0
    %1606 = vmatpush1.msra.mxu0 0.0
    %1607 = vmatprep.subr.mxu0 0.0
    %1608 = vmatpush1.msra.mxu0 0.0
    %1609 = vmatprep.subr.mxu0 0.0
    %1610 = vmatpush1.msra.mxu0 0.0
    %1611 = vmatprep.subr.mxu0 0.0
    %1612 = vmatpush1.msra.mxu0 0.0
    %1613 = vmatprep.subr.mxu0 0.0
    %1614 = vmatpush1.msra.mxu0 0.0
    %1615 = vmatprep.subr.mxu0 0.0
    %1616 = vmatpush1.msra.mxu0 0.0
    %1617 = vmatprep.subr.mxu0 0.0
    %1618 = vmatpush1.msra.mxu0 0.0
    %1619 = vmatprep.subr.mxu0 0.0
    %1620 = vmatpush1.msra.mxu0 0.0
    %1621 = vmatprep.subr.mxu0 0.0
    %1622 = vmatpush1.msra.mxu0 %v38
    %1623 = vmatprep.subr.mxu0 0.0
    %1624 = vmatpush1.msra.mxu0 %v37
    %1625 = vmatprep.subr.mxu0 0.0
    %1626 = vmatpush2.msra.mxu0 0.0
    %1627 = vmatprep.subr.mxu0 0.0
    %1628 = vmatpush2.msra.mxu0 0.0
    %1629 = vmatprep.subr.mxu0 0.0
    %1630 = vmatpush2.msra.mxu0 0.0
    %1631 = vmatprep.subr.mxu0 0.0
    %1632 = vmatpush2.msra.mxu0 0.0
    %1633 = vmatprep.subr.mxu0 0.0
    %1634 = vmatpush2.msra.mxu0 0.0
    %1635 = vmatprep.subr.mxu0 0.0
    %1636 = vmatpush2.msra.mxu0 0.0
    %1637 = vmatprep.subr.mxu0 0.0
    %1638 = vmatpush2.msra.mxu0 0.0
    %1639 = vmatprep.subr.mxu0 0.0
    %1640 = vmatpush2.msra.mxu0 0.0
    %1641 = vmatprep.subr.mxu0 0.0
    %1642 = vmatpush2.msra.mxu0 0.0
    %1643 = vmatprep.subr.mxu0 0.0
    %1644 = vmatpush2.msra.mxu0 0.0
    %1645 = vmatprep.subr.mxu0 0.0
    %1646 = vmatpush2.msra.mxu0 0.0
    %1647 = vmatprep.subr.mxu0 0.0
    %1648 = vmatpush2.msra.mxu0 0.0
    %1649 = vmatprep.subr.mxu0 0.0
    %1650 = vmatpush2.msra.mxu0 0.0
    %1651 = vmatprep.subr.mxu0 0.0
    %1652 = vmatpush2.msra.mxu0 0.0
    %1653 = vmatprep.subr.mxu0 0.0
    %1654 = vmatpush2.msra.mxu0 0.0
    %1655 = vmatprep.subr.mxu0 0.0
    %1656 = vmatpush2.msra.mxu0 0.0
    %1657 = vmatprep.mubr.f32.mxu0 0.0
    %1658 = vmatmul.mubr.f32.gmra.mxu0 %v1591
    %v1659 = vpop.f32.mrf.mxu0
    %v1660 = vadd.f32 %v1572, %v1659
    %v1661 = vpop.f32.mrf.mxu0
    %1662 = vdwg.mxu0
    %vm1663 = vcmask 25600
    %1664 = vst.msk [vmem:[#allocation3] sm:$0x3] %vm1663, %v1660
    // Predicated region
    $region30: #{tpu_custom_call.1} parent=1 // pred_check
      _
    $region31: #{tpu_custom_call.1} parent=1 // pred_check_branch
      %1666 = sbr.rel (0) target = $region33
    $region32: #{tpu_custom_call.1} parent=1 // pred_region
      %s1668 = ssub.s32 32, 32
      %1669 = vsyncadd [#allocation4], %s1668
      %s1671 = sshll.u32 [#allocation3], 4
      %s1672 = int_to_ptr.vmem [resolvable:$true] %s1671
      %1674 = dma.vmem_to_hbm [thread:$0]  %s1672, 32, %s7, [#allocation4]
    $region33: #{tpu_custom_call.1} parent=1 // pred_fallthru
      _
    // Predicated region
    $region34: #{tpu_custom_call.1} parent=1 // pred_check
      _
    $region35: #{tpu_custom_call.1} parent=1 // pred_check_branch
      %1676 = sbr.rel (0) target = $region37
    $region36: #{tpu_custom_call.1} parent=1 // pred_region
      %1677 = dma.done [#allocation4], 32
    $region37: #{tpu_custom_call.1} parent=1 // pred_fallthru
      _
    %1678 = vsyncpa [#allocation4], 1

</llo_original>
